<compile_context>
chip_gen: v5e
topology: v5e:2x2
jax: 0.10.0
libtpu: 0.0.40
codegen_flags: <defaults>
</compile_context>

<pallas_src>
import jax
import jax.numpy as jnp
from jax.experimental import pallas as pl
from jax.experimental.pallas import tpu as pltpu


def _add_conv1x1_kernel(a_ref, b_ref, w_ref, o_ref):
    # a_ref, b_ref: (Cin, HW)   activations, pixels on the lane axis
    # w_ref:        (Cout, Cin)
    # o_ref:        (Cout, HW)
    x = a_ref[...] + b_ref[...]                               # VPU add, (Cin, HW)
    o_ref[...] = jnp.dot(
        w_ref[...], x, preferred_element_type=jnp.float32
    ).astype(o_ref.dtype)                                     # MXU, (Cout, HW)


def add_conv1x1(x231, x217, weight):
    """x231, x217: (N, Cin, H, W) float32.  weight: (Cout, Cin, 1, 1) float32."""
    N, Cin, H, W = x231.shape
    Cout = weight.shape[0]
    HW = H * W

    # Free views (contiguous collapses), no transposes.
    a3d = x231.reshape(N, Cin, HW)
    b3d = x217.reshape(N, Cin, HW)
    w2d = weight.reshape(Cout, Cin)

    cost = pl.CostEstimate(
        flops=2 * N * HW * Cin * Cout,
        transcendentals=0,
        bytes_accessed=(2 * N * Cin * HW + Cin * Cout + N * Cout * HW) * 4,
    )

    out3d = pl.pallas_call(
        _add_conv1x1_kernel,
        out_shape=jax.ShapeDtypeStruct((N, Cout, HW), jnp.float32),
        grid_spec=pltpu.PrefetchScalarGridSpec(
            num_scalar_prefetch=0,
            grid=(N,),                       # N=1 -> a single grid step
            in_specs=[
                # Leading N dim squeezed: kernel sees 2-D (Cin, HW) refs.
                pl.BlockSpec((None, Cin, HW), lambda n: (n, 0, 0)),
                pl.BlockSpec((None, Cin, HW), lambda n: (n, 0, 0)),
                pl.BlockSpec((Cout, Cin), lambda n: (0, 0)),
            ],
            out_specs=pl.BlockSpec((None, Cout, HW), lambda n: (n, 0, 0)),
        ),
        compiler_params=pltpu.CompilerParams(
            dimension_semantics=("parallel",),
        ),
        cost_estimate=cost,
    )(a3d, b3d, w2d)

    # (N, Cout, HW) -> (N, Cout, H, W): free reshape, already NCHW.
    return out3d.reshape(N, Cout, H, W)


if __name__ == "__main__":
    # Shapes implied by the module: Conv2d(80, 480, 1x1); inputs [1, 80, 28, 28].
    N, Cin, H, W, Cout = 1, 80, 28, 28, 480

    key = jax.random.PRNGKey(0)
    k1, k2, k3 = jax.random.split(key, 3)
    x231 = jax.random.normal(k1, (N, Cin, H, W), dtype=jnp.float32)
    x217 = jax.random.normal(k2, (N, Cin, H, W), dtype=jnp.float32)
    # Deterministic weight init (Kaiming-ish scale), shape (Cout, Cin, 1, 1).
    weight = jax.random.normal(k3, (Cout, Cin, 1, 1), dtype=jnp.float32) * (1.0 / (Cin ** 0.5))

    out = add_conv1x1(x231, x217, weight)
    out = jax.block_until_ready(out)

    # Cross-check against plain-JAX reference (1x1 conv == channel matmul).
    ref = jnp.einsum(
        "nchw,oc->nohw", x231 + x217, weight.reshape(Cout, Cin)
    )
    assert out.shape == (N, Cout, H, W)
    assert jnp.allclose(out, ref, atol=1e-3, rtol=1e-3)

    print("KERNEL_OK")
</pallas_src>

<mosaic_0001>
module attributes {stable_mosaic.version = 11 : i64} {
  func.func @_add_conv1x1_kernel(%arg0: i32, %arg1: memref<1x80x784xf32, #tpu.memory_space<vmem>>, %arg2: memref<1x80x784xf32, #tpu.memory_space<vmem>>, %arg3: memref<480x80xf32, #tpu.memory_space<vmem>>, %arg4: memref<1x480x784xf32, #tpu.memory_space<vmem>>) attributes {dimension_semantics = [#tpu.dimension_semantics<parallel>], iteration_bounds = array<i64: 1>, scalar_prefetch = 0 : i64, scratch_operands = 0 : i64, tpu.core_type = #tpu.core_type<tc>, window_params = [{transform_indices = @transform_0, window_bounds = array<i64: 1, 80, 784>}, {transform_indices = @transform_1, window_bounds = array<i64: 1, 80, 784>}, {pipeline_mode = #tpu.pipeline_mode<synchronous>, transform_indices = @transform_2, window_bounds = array<i64: 480, 80>}, {transform_indices = @transform_3, window_bounds = array<i64: 1, 480, 784>}]} {
    %c0 = arith.constant 0 : index
    %c0_0 = arith.constant 0 : index
    %c0_1 = arith.constant 0 : index
    %0 = vector.load %arg1[%c0, %c0_0, %c0_1] : memref<1x80x784xf32, #tpu.memory_space<vmem>>, vector<1x80x784xf32>
    %1 = vector.shape_cast %0 : vector<1x80x784xf32> to vector<80x784xf32>
    %c0_2 = arith.constant 0 : index
    %c0_3 = arith.constant 0 : index
    %c0_4 = arith.constant 0 : index
    %2 = vector.load %arg2[%c0_2, %c0_3, %c0_4] : memref<1x80x784xf32, #tpu.memory_space<vmem>>, vector<1x80x784xf32>
    %3 = vector.shape_cast %2 : vector<1x80x784xf32> to vector<80x784xf32>
    %4 = arith.addf %1, %3 : vector<80x784xf32>
    %c0_5 = arith.constant 0 : index
    %c0_6 = arith.constant 0 : index
    %5 = vector.load %arg3[%c0_5, %c0_6] : memref<480x80xf32, #tpu.memory_space<vmem>>, vector<480x80xf32>
    %cst = arith.constant dense<0.000000e+00> : vector<480x784xf32>
    %6 = tpu.matmul %5, %4, %cst {dimension_numbers = #tpu.dot_dimension_numbers<[1], [0], [0], [1], [0, 0, 1, 1], [], []>} : vector<480x80xf32>, vector<80x784xf32>, vector<480x784xf32> -> vector<480x784xf32>
    %c0_7 = arith.constant 0 : index
    %c0_8 = arith.constant 0 : index
    %c0_9 = arith.constant 0 : index
    %7 = vector.load %arg4[%c0_7, %c0_8, %c0_9] : memref<1x480x784xf32, #tpu.memory_space<vmem>>, vector<1x480x784xf32>
    %8 = vector.shape_cast %7 : vector<1x480x784xf32> to vector<480x784xf32>
    %9 = vector.shape_cast %6 : vector<480x784xf32> to vector<1x480x784xf32>
    tpu.vector_store %arg4[%c0_7, %c0_8, %c0_9], %9 {strides = array<i32>} : memref<1x480x784xf32, #tpu.memory_space<vmem>>, vector<1x480x784xf32>,
    return
  }
  func.func @transform_0(%arg0: i32) -> (i32, i32, i32) {
    %c0_i32 = arith.constant 0 : i32
    %c0_i32_0 = arith.constant 0 : i32
    %c0_i32_1 = arith.constant 0 : i32
    return %arg0, %c0_i32, %c0_i32_0 : i32, i32, i32
  }
  func.func @transform_1(%arg0: i32) -> (i32, i32, i32) {
    %c0_i32 = arith.constant 0 : i32
    %c0_i32_0 = arith.constant 0 : i32
    %c0_i32_1 = arith.constant 0 : i32
    return %arg0, %c0_i32, %c0_i32_0 : i32, i32, i32
  }
  func.func @transform_2(%arg0: i32) -> (i32, i32) {
    %c0_i32 = arith.constant 0 : i32
    %c0_i32_0 = arith.constant 0 : i32
    %c0_i32_1 = arith.constant 0 : i32
    return %c0_i32, %c0_i32_0 : i32, i32
  }
  func.func @transform_3(%arg0: i32) -> (i32, i32, i32) {
    %c0_i32 = arith.constant 0 : i32
    %c0_i32_0 = arith.constant 0 : i32
    %c0_i32_1 = arith.constant 0 : i32
    return %arg0, %c0_i32, %c0_i32_0 : i32, i32, i32
  }
}

</mosaic_0001>

<llo_original>
// kernel: tpu_custom_call.1
$region0: #{tpu_custom_call.1}
  #allocation0 [shape = 'u32[]', space=smem, size = 0x4, offset = 0x4, fixed_abs, tag = 'smem constant byte address 0x4 - core index']
  #allocation1 [shape = 'u32[72,128]{1,0:T(1,128)}', space=vmem, size = 0x9000, scoped, tag = 'internal scratch']
  %s0 = inlined_call_operand.hbm [shape: f32[1,80,784], index: 0, kind: input, shape index: {}]
  %s1 = inlined_call_operand.hbm [shape: f32[1,80,784], index: 1, kind: input, shape index: {}]
  %s2 = inlined_call_operand.vmem [shape: f32[480,80], index: 2, kind: input, shape index: {}]
  %s3 = inlined_call_operand.vmem [shape: f32[1,480,784], index: 3, kind: output, shape index: {}]
  %s4 = sld [smem:[#allocation0]]
  $region30: #{tpu_custom_call.1} parent=0
    _
  %s6 = ssub.s32 1, %s4
  %s7 = scalar_select 0, %s6, %s4
  $region1: #{tpu_custom_call.1} parent=0
    #allocation2 [shape = 'u8[286720]{0}', space=vmem, size = 0x46000, scoped, tag = 'input window, operand 0, single buffered']
    #allocation3 [shape = 's32[1]{0}', space=sflag, size = 0x4, scoped, tag = 'scoped memory for tpu_custom_call.1']
    #allocation4 [shape = 'u8[286720]{0}', space=vmem, size = 0x46000, scoped, tag = 'input window, operand 1, single buffered']
    #allocation5 [shape = 's32[1]{0}', space=sflag, size = 0x4, scoped, tag = 'scoped memory for tpu_custom_call.1']
    %8 = vsyncpa [#allocation3], 0
    %9 = vsyncpa [#allocation5], 0
    // Predicated region
    $region2: #{tpu_custom_call.1} parent=1 // pred_check
      _
    $region3: #{tpu_custom_call.1} parent=1 // pred_check_branch
      %11 = sbr.rel (0) target = $region5
    $region4: #{tpu_custom_call.1} parent=1 // pred_region
      %13 = vsyncadd [#allocation3], 0
      %s14 = sshll.u32 %s0, 4
      %s15 = int_to_ptr.hbm [resolvable:$true] %s14
      %s16 = sshll.u32 [#allocation2], 4
      %s17 = int_to_ptr.vmem [resolvable:$true] %s16
      %22 = dma.hbm_to_vmem [thread:$0]  %s15, 8960, %s17, [#allocation3], 896, 896, 56
    $region5: #{tpu_custom_call.1} parent=1 // pred_fallthru
      _
    // Predicated region
    $region6: #{tpu_custom_call.1} parent=1 // pred_check
      _
    $region7: #{tpu_custom_call.1} parent=1 // pred_check_branch
      %24 = sbr.rel (0) target = $region9
    $region8: #{tpu_custom_call.1} parent=1 // pred_region
      %26 = vsyncadd [#allocation5], 0
      %s27 = sshll.u32 %s1, 4
      %s28 = int_to_ptr.hbm [resolvable:$true] %s27
      %s29 = sshll.u32 [#allocation4], 4
      %s30 = int_to_ptr.vmem [resolvable:$true] %s29
      %35 = dma.hbm_to_vmem [thread:$0]  %s28, 8960, %s30, [#allocation5], 896, 896, 56
    $region9: #{tpu_custom_call.1} parent=1 // pred_fallthru
      _
    // Predicated region
    $region10: #{tpu_custom_call.1} parent=1 // pred_check
      _
    $region11: #{tpu_custom_call.1} parent=1 // pred_check_branch
      %37 = sbr.rel (0) target = $region13
    $region12: #{tpu_custom_call.1} parent=1 // pred_region
      _
    $region13: #{tpu_custom_call.1} parent=1 // pred_fallthru
      _
    // Predicated region
    $region14: #{tpu_custom_call.1} parent=1 // pred_check
      _
    $region15: #{tpu_custom_call.1} parent=1 // pred_check_branch
      %39 = sbr.rel (0) target = $region17
    $region16: #{tpu_custom_call.1} parent=1 // pred_region
      %41 = dma.done [#allocation3], 8960
    $region17: #{tpu_custom_call.1} parent=1 // pred_fallthru
      _
    // Predicated region
    $region18: #{tpu_custom_call.1} parent=1 // pred_check
      _
    $region19: #{tpu_custom_call.1} parent=1 // pred_check_branch
      %43 = sbr.rel (0) target = $region21
    $region20: #{tpu_custom_call.1} parent=1 // pred_region
      %45 = dma.done [#allocation5], 8960
    $region21: #{tpu_custom_call.1} parent=1 // pred_fallthru
      _
    %v46 = vld [vmem:[#allocation2] sm:$0xff]
    %v47 = vld [vmem:[#allocation2 + $0x8] sm:$0xff]
    %v48 = vld [vmem:[#allocation2 + $0x10] sm:$0xff]
    %v49 = vld [vmem:[#allocation2 + $0x18] sm:$0xff]
    %v50 = vld [vmem:[#allocation2 + $0x20] sm:$0xff]
    %v51 = vld [vmem:[#allocation2 + $0x28] sm:$0xff]
    %v52 = vld [vmem:[#allocation2 + $0x30] sm:$0xff]
    %v53 = vld [vmem:[#allocation2 + $0x38] sm:$0xff]
    %v54 = vld [vmem:[#allocation2 + $0x40] sm:$0xff]
    %v55 = vld [vmem:[#allocation2 + $0x48] sm:$0xff]
    %v56 = vld [vmem:[#allocation2 + $0x50] sm:$0xff]
    %v57 = vld [vmem:[#allocation2 + $0x58] sm:$0xff]
    %v58 = vld [vmem:[#allocation2 + $0x60] sm:$0xff]
    %v59 = vld [vmem:[#allocation2 + $0x68] sm:$0xff]
    %v60 = vld [vmem:[#allocation2 + $0x70] sm:$0xff]
    %v61 = vld [vmem:[#allocation2 + $0x78] sm:$0xff]
    %v62 = vld [vmem:[#allocation2 + $0x80] sm:$0xff]
    %v63 = vld [vmem:[#allocation2 + $0x88] sm:$0xff]
    %v64 = vld [vmem:[#allocation2 + $0x90] sm:$0xff]
    %v65 = vld [vmem:[#allocation2 + $0x98] sm:$0xff]
    %v66 = vld [vmem:[#allocation2 + $0xa0] sm:$0xff]
    %v67 = vld [vmem:[#allocation2 + $0xa8] sm:$0xff]
    %v68 = vld [vmem:[#allocation2 + $0xb0] sm:$0xff]
    %v69 = vld [vmem:[#allocation2 + $0xb8] sm:$0xff]
    %v70 = vld [vmem:[#allocation2 + $0xc0] sm:$0xff]
    %v71 = vld [vmem:[#allocation2 + $0xc8] sm:$0xff]
    %v72 = vld [vmem:[#allocation2 + $0xd0] sm:$0xff]
    %v73 = vld [vmem:[#allocation2 + $0xd8] sm:$0xff]
    %v74 = vld [vmem:[#allocation2 + $0xe0] sm:$0xff]
    %v75 = vld [vmem:[#allocation2 + $0xe8] sm:$0xff]
    %v76 = vld [vmem:[#allocation2 + $0xf0] sm:$0xff]
    %v77 = vld [vmem:[#allocation2 + $0xf8] sm:$0xff]
    %v78 = vld [vmem:[#allocation2 + $0x100] sm:$0xff]
    %v79 = vld [vmem:[#allocation2 + $0x108] sm:$0xff]
    %v80 = vld [vmem:[#allocation2 + $0x110] sm:$0xff]
    %v81 = vld [vmem:[#allocation2 + $0x118] sm:$0xff]
    %v82 = vld [vmem:[#allocation2 + $0x120] sm:$0xff]
    %v83 = vld [vmem:[#allocation2 + $0x128] sm:$0xff]
    %v84 = vld [vmem:[#allocation2 + $0x130] sm:$0xff]
    %v85 = vld [vmem:[#allocation2 + $0x138] sm:$0xff]
    %v86 = vld [vmem:[#allocation2 + $0x140] sm:$0xff]
    %v87 = vld [vmem:[#allocation2 + $0x148] sm:$0xff]
    %v88 = vld [vmem:[#allocation2 + $0x150] sm:$0xff]
    %v89 = vld [vmem:[#allocation2 + $0x158] sm:$0xff]
    %v90 = vld [vmem:[#allocation2 + $0x160] sm:$0xff]
    %v91 = vld [vmem:[#allocation2 + $0x168] sm:$0xff]
    %v92 = vld [vmem:[#allocation2 + $0x170] sm:$0xff]
    %v93 = vld [vmem:[#allocation2 + $0x178] sm:$0xff]
    %v94 = vld [vmem:[#allocation2 + $0x180] sm:$0xff]
    %v95 = vld [vmem:[#allocation2 + $0x188] sm:$0xff]
    %v96 = vld [vmem:[#allocation2 + $0x190] sm:$0xff]
    %v97 = vld [vmem:[#allocation2 + $0x198] sm:$0xff]
    %v98 = vld [vmem:[#allocation2 + $0x1a0] sm:$0xff]
    %v99 = vld [vmem:[#allocation2 + $0x1a8] sm:$0xff]
    %v100 = vld [vmem:[#allocation2 + $0x1b0] sm:$0xff]
    %v101 = vld [vmem:[#allocation2 + $0x1b8] sm:$0xff]
    %v102 = vld [vmem:[#allocation2 + $0x1c0] sm:$0xff]
    %v103 = vld [vmem:[#allocation2 + $0x1c8] sm:$0xff]
    %v104 = vld [vmem:[#allocation2 + $0x1d0] sm:$0xff]
    %v105 = vld [vmem:[#allocation2 + $0x1d8] sm:$0xff]
    %v106 = vld [vmem:[#allocation2 + $0x1e0] sm:$0xff]
    %v107 = vld [vmem:[#allocation2 + $0x1e8] sm:$0xff]
    %v108 = vld [vmem:[#allocation2 + $0x1f0] sm:$0xff]
    %v109 = vld [vmem:[#allocation2 + $0x1f8] sm:$0xff]
    %v110 = vld [vmem:[#allocation2 + $0x200] sm:$0xff]
    %v111 = vld [vmem:[#allocation2 + $0x208] sm:$0xff]
    %v112 = vld [vmem:[#allocation2 + $0x210] sm:$0xff]
    %v113 = vld [vmem:[#allocation2 + $0x218] sm:$0xff]
    %v114 = vld [vmem:[#allocation2 + $0x220] sm:$0xff]
    %v115 = vld [vmem:[#allocation2 + $0x228] sm:$0xff]
    %v116 = vld [vmem:[#allocation4] sm:$0xff]
    %v117 = vld [vmem:[#allocation4 + $0x8] sm:$0xff]
    %v118 = vld [vmem:[#allocation4 + $0x10] sm:$0xff]
    %v119 = vld [vmem:[#allocation4 + $0x18] sm:$0xff]
    %v120 = vld [vmem:[#allocation4 + $0x20] sm:$0xff]
    %v121 = vld [vmem:[#allocation4 + $0x28] sm:$0xff]
    %v122 = vld [vmem:[#allocation4 + $0x30] sm:$0xff]
    %v123 = vld [vmem:[#allocation4 + $0x38] sm:$0xff]
    %v124 = vld [vmem:[#allocation4 + $0x40] sm:$0xff]
    %v125 = vld [vmem:[#allocation4 + $0x48] sm:$0xff]
    %v126 = vld [vmem:[#allocation4 + $0x50] sm:$0xff]
    %v127 = vld [vmem:[#allocation4 + $0x58] sm:$0xff]
    %v128 = vld [vmem:[#allocation4 + $0x60] sm:$0xff]
    %v129 = vld [vmem:[#allocation4 + $0x68] sm:$0xff]
    %v130 = vld [vmem:[#allocation4 + $0x70] sm:$0xff]
    %v131 = vld [vmem:[#allocation4 + $0x78] sm:$0xff]
    %v132 = vld [vmem:[#allocation4 + $0x80] sm:$0xff]
    %v133 = vld [vmem:[#allocation4 + $0x88] sm:$0xff]
    %v134 = vld [vmem:[#allocation4 + $0x90] sm:$0xff]
    %v135 = vld [vmem:[#allocation4 + $0x98] sm:$0xff]
    %v136 = vld [vmem:[#allocation4 + $0xa0] sm:$0xff]
    %v137 = vld [vmem:[#allocation4 + $0xa8] sm:$0xff]
    %v138 = vld [vmem:[#allocation4 + $0xb0] sm:$0xff]
    %v139 = vld [vmem:[#allocation4 + $0xb8] sm:$0xff]
    %v140 = vld [vmem:[#allocation4 + $0xc0] sm:$0xff]
    %v141 = vld [vmem:[#allocation4 + $0xc8] sm:$0xff]
    %v142 = vld [vmem:[#allocation4 + $0xd0] sm:$0xff]
    %v143 = vld [vmem:[#allocation4 + $0xd8] sm:$0xff]
    %v144 = vld [vmem:[#allocation4 + $0xe0] sm:$0xff]
    %v145 = vld [vmem:[#allocation4 + $0xe8] sm:$0xff]
    %v146 = vld [vmem:[#allocation4 + $0xf0] sm:$0xff]
    %v147 = vld [vmem:[#allocation4 + $0xf8] sm:$0xff]
    %v148 = vld [vmem:[#allocation4 + $0x100] sm:$0xff]
    %v149 = vld [vmem:[#allocation4 + $0x108] sm:$0xff]
    %v150 = vld [vmem:[#allocation4 + $0x110] sm:$0xff]
    %v151 = vld [vmem:[#allocation4 + $0x118] sm:$0xff]
    %v152 = vld [vmem:[#allocation4 + $0x120] sm:$0xff]
    %v153 = vld [vmem:[#allocation4 + $0x128] sm:$0xff]
    %v154 = vld [vmem:[#allocation4 + $0x130] sm:$0xff]
    %v155 = vld [vmem:[#allocation4 + $0x138] sm:$0xff]
    %v156 = vld [vmem:[#allocation4 + $0x140] sm:$0xff]
    %v157 = vld [vmem:[#allocation4 + $0x148] sm:$0xff]
    %v158 = vld [vmem:[#allocation4 + $0x150] sm:$0xff]
    %v159 = vld [vmem:[#allocation4 + $0x158] sm:$0xff]
    %v160 = vld [vmem:[#allocation4 + $0x160] sm:$0xff]
    %v161 = vld [vmem:[#allocation4 + $0x168] sm:$0xff]
    %v162 = vld [vmem:[#allocation4 + $0x170] sm:$0xff]
    %v163 = vld [vmem:[#allocation4 + $0x178] sm:$0xff]
    %v164 = vld [vmem:[#allocation4 + $0x180] sm:$0xff]
    %v165 = vld [vmem:[#allocation4 + $0x188] sm:$0xff]
    %v166 = vld [vmem:[#allocation4 + $0x190] sm:$0xff]
    %v167 = vld [vmem:[#allocation4 + $0x198] sm:$0xff]
    %v168 = vld [vmem:[#allocation4 + $0x1a0] sm:$0xff]
    %v169 = vld [vmem:[#allocation4 + $0x1a8] sm:$0xff]
    %v170 = vld [vmem:[#allocation4 + $0x1b0] sm:$0xff]
    %v171 = vld [vmem:[#allocation4 + $0x1b8] sm:$0xff]
    %v172 = vld [vmem:[#allocation4 + $0x1c0] sm:$0xff]
    %v173 = vld [vmem:[#allocation4 + $0x1c8] sm:$0xff]
    %v174 = vld [vmem:[#allocation4 + $0x1d0] sm:$0xff]
    %v175 = vld [vmem:[#allocation4 + $0x1d8] sm:$0xff]
    %v176 = vld [vmem:[#allocation4 + $0x1e0] sm:$0xff]
    %v177 = vld [vmem:[#allocation4 + $0x1e8] sm:$0xff]
    %v178 = vld [vmem:[#allocation4 + $0x1f0] sm:$0xff]
    %v179 = vld [vmem:[#allocation4 + $0x1f8] sm:$0xff]
    %v180 = vld [vmem:[#allocation4 + $0x200] sm:$0xff]
    %v181 = vld [vmem:[#allocation4 + $0x208] sm:$0xff]
    %v182 = vld [vmem:[#allocation4 + $0x210] sm:$0xff]
    %v183 = vld [vmem:[#allocation4 + $0x218] sm:$0xff]
    %v184 = vld [vmem:[#allocation4 + $0x220] sm:$0xff]
    %v185 = vld [vmem:[#allocation4 + $0x228] sm:$0xff]
    %v186 = vadd.f32 %v46, %v116
    %v187 = vadd.f32 %v47, %v117
    %v188 = vadd.f32 %v48, %v118
    %v189 = vadd.f32 %v49, %v119
    %v190 = vadd.f32 %v50, %v120
    %v191 = vadd.f32 %v51, %v121
    %v192 = vadd.f32 %v52, %v122
    %v193 = vadd.f32 %v53, %v123
    %v194 = vadd.f32 %v54, %v124
    %v195 = vadd.f32 %v55, %v125
    %v196 = vadd.f32 %v56, %v126
    %v197 = vadd.f32 %v57, %v127
    %v198 = vadd.f32 %v58, %v128
    %v199 = vadd.f32 %v59, %v129
    %v200 = vadd.f32 %v60, %v130
    %v201 = vadd.f32 %v61, %v131
    %v202 = vadd.f32 %v62, %v132
    %v203 = vadd.f32 %v63, %v133
    %v204 = vadd.f32 %v64, %v134
    %v205 = vadd.f32 %v65, %v135
    %v206 = vadd.f32 %v66, %v136
    %v207 = vadd.f32 %v67, %v137
    %v208 = vadd.f32 %v68, %v138
    %v209 = vadd.f32 %v69, %v139
    %v210 = vadd.f32 %v70, %v140
    %v211 = vadd.f32 %v71, %v141
    %v212 = vadd.f32 %v72, %v142
    %v213 = vadd.f32 %v73, %v143
    %v214 = vadd.f32 %v74, %v144
    %v215 = vadd.f32 %v75, %v145
    %v216 = vadd.f32 %v76, %v146
    %v217 = vadd.f32 %v77, %v147
    %v218 = vadd.f32 %v78, %v148
    %v219 = vadd.f32 %v79, %v149
    %v220 = vadd.f32 %v80, %v150
    %v221 = vadd.f32 %v81, %v151
    %v222 = vadd.f32 %v82, %v152
    %v223 = vadd.f32 %v83, %v153
    %v224 = vadd.f32 %v84, %v154
    %v225 = vadd.f32 %v85, %v155
    %v226 = vadd.f32 %v86, %v156
    %v227 = vadd.f32 %v87, %v157
    %v228 = vadd.f32 %v88, %v158
    %v229 = vadd.f32 %v89, %v159
    %v230 = vadd.f32 %v90, %v160
    %v231 = vadd.f32 %v91, %v161
    %v232 = vadd.f32 %v92, %v162
    %v233 = vadd.f32 %v93, %v163
    %v234 = vadd.f32 %v94, %v164
    %v235 = vadd.f32 %v95, %v165
    %v236 = vadd.f32 %v96, %v166
    %v237 = vadd.f32 %v97, %v167
    %v238 = vadd.f32 %v98, %v168
    %v239 = vadd.f32 %v99, %v169
    %v240 = vadd.f32 %v100, %v170
    %v241 = vadd.f32 %v101, %v171
    %v242 = vadd.f32 %v102, %v172
    %v243 = vadd.f32 %v103, %v173
    %v244 = vadd.f32 %v104, %v174
    %v245 = vadd.f32 %v105, %v175
    %v246 = vadd.f32 %v106, %v176
    %v247 = vadd.f32 %v107, %v177
    %v248 = vadd.f32 %v108, %v178
    %v249 = vadd.f32 %v109, %v179
    %v250 = vadd.f32 %v110, %v180
    %v251 = vadd.f32 %v111, %v181
    %v252 = vadd.f32 %v112, %v182
    %v253 = vadd.f32 %v113, %v183
    %v254 = vadd.f32 %v114, %v184
    %v255 = vadd.f32 %v115, %v185
    %v256 = vld [vmem:[%s2] sm:$0xff]
    %v257 = vld [vmem:[%s2 + $0x8] sm:$0xff]
    %v258 = vld [vmem:[%s2 + $0x10] sm:$0xff]
    %v259 = vld [vmem:[%s2 + $0x18] sm:$0xff]
    %v260 = vld [vmem:[%s2 + $0x20] sm:$0xff]
    %v261 = vld [vmem:[%s2 + $0x28] sm:$0xff]
    %v262 = vld [vmem:[%s2 + $0x30] sm:$0xff]
    %v263 = vld [vmem:[%s2 + $0x38] sm:$0xff]
    %v264 = vld [vmem:[%s2 + $0x40] sm:$0xff]
    %v265 = vld [vmem:[%s2 + $0x48] sm:$0xff]
    %v266 = vld [vmem:[%s2 + $0x50] sm:$0xff]
    %v267 = vld [vmem:[%s2 + $0x58] sm:$0xff]
    %v268 = vld [vmem:[%s2 + $0x60] sm:$0xff]
    %v269 = vld [vmem:[%s2 + $0x68] sm:$0xff]
    %v270 = vld [vmem:[%s2 + $0x70] sm:$0xff]
    %v271 = vld [vmem:[%s2 + $0x78] sm:$0xff]
    %v272 = vld [vmem:[%s2 + $0x80] sm:$0xff]
    %v273 = vld [vmem:[%s2 + $0x88] sm:$0xff]
    %v274 = vld [vmem:[%s2 + $0x90] sm:$0xff]
    %v275 = vld [vmem:[%s2 + $0x98] sm:$0xff]
    %v276 = vld [vmem:[%s2 + $0xa0] sm:$0xff]
    %v277 = vld [vmem:[%s2 + $0xa8] sm:$0xff]
    %v278 = vld [vmem:[%s2 + $0xb0] sm:$0xff]
    %v279 = vld [vmem:[%s2 + $0xb8] sm:$0xff]
    %v280 = vld [vmem:[%s2 + $0xc0] sm:$0xff]
    %v281 = vld [vmem:[%s2 + $0xc8] sm:$0xff]
    %v282 = vld [vmem:[%s2 + $0xd0] sm:$0xff]
    %v283 = vld [vmem:[%s2 + $0xd8] sm:$0xff]
    %v284 = vld [vmem:[%s2 + $0xe0] sm:$0xff]
    %v285 = vld [vmem:[%s2 + $0xe8] sm:$0xff]
    %v286 = vld [vmem:[%s2 + $0xf0] sm:$0xff]
    %v287 = vld [vmem:[%s2 + $0xf8] sm:$0xff]
    %v288 = vld [vmem:[%s2 + $0x100] sm:$0xff]
    %v289 = vld [vmem:[%s2 + $0x108] sm:$0xff]
    %v290 = vld [vmem:[%s2 + $0x110] sm:$0xff]
    %v291 = vld [vmem:[%s2 + $0x118] sm:$0xff]
    %v292 = vld [vmem:[%s2 + $0x120] sm:$0xff]
    %v293 = vld [vmem:[%s2 + $0x128] sm:$0xff]
    %v294 = vld [vmem:[%s2 + $0x130] sm:$0xff]
    %v295 = vld [vmem:[%s2 + $0x138] sm:$0xff]
    %v296 = vld [vmem:[%s2 + $0x140] sm:$0xff]
    %v297 = vld [vmem:[%s2 + $0x148] sm:$0xff]
    %v298 = vld [vmem:[%s2 + $0x150] sm:$0xff]
    %v299 = vld [vmem:[%s2 + $0x158] sm:$0xff]
    %v300 = vld [vmem:[%s2 + $0x160] sm:$0xff]
    %v301 = vld [vmem:[%s2 + $0x168] sm:$0xff]
    %v302 = vld [vmem:[%s2 + $0x170] sm:$0xff]
    %v303 = vld [vmem:[%s2 + $0x178] sm:$0xff]
    %v304 = vld [vmem:[%s2 + $0x180] sm:$0xff]
    %v305 = vld [vmem:[%s2 + $0x188] sm:$0xff]
    %v306 = vld [vmem:[%s2 + $0x190] sm:$0xff]
    %v307 = vld [vmem:[%s2 + $0x198] sm:$0xff]
    %v308 = vld [vmem:[%s2 + $0x1a0] sm:$0xff]
    %v309 = vld [vmem:[%s2 + $0x1a8] sm:$0xff]
    %v310 = vld [vmem:[%s2 + $0x1b0] sm:$0xff]
    %v311 = vld [vmem:[%s2 + $0x1b8] sm:$0xff]
    %v312 = vld [vmem:[%s2 + $0x1c0] sm:$0xff]
    %v313 = vld [vmem:[%s2 + $0x1c8] sm:$0xff]
    %v314 = vld [vmem:[%s2 + $0x1d0] sm:$0xff]
    %v315 = vld [vmem:[%s2 + $0x1d8] sm:$0xff]
    %vm316 = vcmask 654336
    %v318 = vsel %vm316, %v256, 0
    %v321 = vsel %vm316, %v257, 0
    %v324 = vsel %vm316, %v258, 0
    %v327 = vsel %vm316, %v259, 0
    %v330 = vsel %vm316, %v260, 0
    %v333 = vsel %vm316, %v261, 0
    %v336 = vsel %vm316, %v262, 0
    %v339 = vsel %vm316, %v263, 0
    %v342 = vsel %vm316, %v264, 0
    %v345 = vsel %vm316, %v265, 0
    %v348 = vsel %vm316, %v266, 0
    %v351 = vsel %vm316, %v267, 0
    %v354 = vsel %vm316, %v268, 0
    %v357 = vsel %vm316, %v269, 0
    %v360 = vsel %vm316, %v270, 0
    %v363 = vsel %vm316, %v271, 0
    %v366 = vsel %vm316, %v272, 0
    %v369 = vsel %vm316, %v273, 0
    %v372 = vsel %vm316, %v274, 0
    %v375 = vsel %vm316, %v275, 0
    %v378 = vsel %vm316, %v276, 0
    %v381 = vsel %vm316, %v277, 0
    %v384 = vsel %vm316, %v278, 0
    %v387 = vsel %vm316, %v279, 0
    %v390 = vsel %vm316, %v280, 0
    %v393 = vsel %vm316, %v281, 0
    %v396 = vsel %vm316, %v282, 0
    %v399 = vsel %vm316, %v283, 0
    %v402 = vsel %vm316, %v284, 0
    %v405 = vsel %vm316, %v285, 0
    %v408 = vsel %vm316, %v286, 0
    %v411 = vsel %vm316, %v287, 0
    %v414 = vsel %vm316, %v288, 0
    %v417 = vsel %vm316, %v289, 0
    %v420 = vsel %vm316, %v290, 0
    %v423 = vsel %vm316, %v291, 0
    %v426 = vsel %vm316, %v292, 0
    %v429 = vsel %vm316, %v293, 0
    %v432 = vsel %vm316, %v294, 0
    %v435 = vsel %vm316, %v295, 0
    %v438 = vsel %vm316, %v296, 0
    %v441 = vsel %vm316, %v297, 0
    %v444 = vsel %vm316, %v298, 0
    %v447 = vsel %vm316, %v299, 0
    %v450 = vsel %vm316, %v300, 0
    %v453 = vsel %vm316, %v301, 0
    %v456 = vsel %vm316, %v302, 0
    %v459 = vsel %vm316, %v303, 0
    %v462 = vsel %vm316, %v304, 0
    %v465 = vsel %vm316, %v305, 0
    %v468 = vsel %vm316, %v306, 0
    %v471 = vsel %vm316, %v307, 0
    %v474 = vsel %vm316, %v308, 0
    %v477 = vsel %vm316, %v309, 0
    %v480 = vsel %vm316, %v310, 0
    %v483 = vsel %vm316, %v311, 0
    %v486 = vsel %vm316, %v312, 0
    %v489 = vsel %vm316, %v313, 0
    %v492 = vsel %vm316, %v314, 0
    %v495 = vsel %vm316, %v315, 0
    %497 = vmatpush.msra.mxu0 0.0
    %498 = vmatpush.msra.mxu0 0.0
    %499 = vmatpush.msra.mxu0 0.0
    %500 = vmatpush.msra.mxu0 0.0
    %501 = vmatpush.msra.mxu0 0.0
    %502 = vmatpush.msra.mxu0 0.0
    %503 = vmatpush.msra.mxu0 %v249
    %504 = vmatpush.msra.mxu0 %v242
    %505 = vmatpush.msra.mxu0 %v235
    %506 = vmatpush.msra.mxu0 %v228
    %507 = vmatpush.msra.mxu0 %v221
    %508 = vmatpush.msra.mxu0 %v214
    %509 = vmatpush.msra.mxu0 %v207
    %510 = vmatpush.msra.mxu0 %v200
    %511 = vmatpush.msra.mxu0 %v193
    %512 = vmatpush.msra.mxu0 %v186
    %513 = vmatmul.f32.gmra.mxu0 %v318
    %v514 = vpop.f32.mrf.mxu0
    %v515 = vadd.f32 0.0, %v514
    %516 = vmatmul.f32.gmra.mxu0 %v321
    %v517 = vpop.f32.mrf.mxu0
    %v518 = vadd.f32 0.0, %v517
    %519 = vmatmul.f32.gmra.mxu0 %v324
    %v520 = vpop.f32.mrf.mxu0
    %v521 = vadd.f32 0.0, %v520
    %522 = vmatmul.f32.gmra.mxu0 %v327
    %v523 = vpop.f32.mrf.mxu0
    %v524 = vadd.f32 0.0, %v523
    %525 = vmatmul.f32.gmra.mxu0 %v330
    %v526 = vpop.f32.mrf.mxu0
    %v527 = vadd.f32 0.0, %v526
    %528 = vmatmul.f32.gmra.mxu0 %v333
    %v529 = vpop.f32.mrf.mxu0
    %v530 = vadd.f32 0.0, %v529
    %531 = vmatmul.f32.gmra.mxu0 %v336
    %v532 = vpop.f32.mrf.mxu0
    %v533 = vadd.f32 0.0, %v532
    %534 = vmatmul.f32.gmra.mxu0 %v339
    %v535 = vpop.f32.mrf.mxu0
    %v536 = vadd.f32 0.0, %v535
    %537 = vmatmul.f32.gmra.mxu0 %v342
    %v538 = vpop.f32.mrf.mxu0
    %v539 = vadd.f32 0.0, %v538
    %540 = vmatmul.f32.gmra.mxu0 %v345
    %v541 = vpop.f32.mrf.mxu0
    %v542 = vadd.f32 0.0, %v541
    %543 = vmatmul.f32.gmra.mxu0 %v348
    %v544 = vpop.f32.mrf.mxu0
    %v545 = vadd.f32 0.0, %v544
    %546 = vmatmul.f32.gmra.mxu0 %v351
    %v547 = vpop.f32.mrf.mxu0
    %v548 = vadd.f32 0.0, %v547
    %549 = vmatmul.f32.gmra.mxu0 %v354
    %v550 = vpop.f32.mrf.mxu0
    %v551 = vadd.f32 0.0, %v550
    %552 = vmatmul.f32.gmra.mxu0 %v357
    %v553 = vpop.f32.mrf.mxu0
    %v554 = vadd.f32 0.0, %v553
    %555 = vmatmul.f32.gmra.mxu0 %v360
    %v556 = vpop.f32.mrf.mxu0
    %v557 = vadd.f32 0.0, %v556
    %558 = vmatmul.f32.gmra.mxu0 %v363
    %v559 = vpop.f32.mrf.mxu0
    %v560 = vadd.f32 0.0, %v559
    %561 = vmatmul.f32.gmra.mxu0 %v366
    %v562 = vpop.f32.mrf.mxu0
    %v563 = vadd.f32 0.0, %v562
    %564 = vmatmul.f32.gmra.mxu0 %v369
    %v565 = vpop.f32.mrf.mxu0
    %v566 = vadd.f32 0.0, %v565
    %567 = vmatmul.f32.gmra.mxu0 %v372
    %v568 = vpop.f32.mrf.mxu0
    %v569 = vadd.f32 0.0, %v568
    %570 = vmatmul.f32.gmra.mxu0 %v375
    %v571 = vpop.f32.mrf.mxu0
    %v572 = vadd.f32 0.0, %v571
    %573 = vmatmul.f32.gmra.mxu0 %v378
    %v574 = vpop.f32.mrf.mxu0
    %v575 = vadd.f32 0.0, %v574
    %576 = vmatmul.f32.gmra.mxu0 %v381
    %v577 = vpop.f32.mrf.mxu0
    %v578 = vadd.f32 0.0, %v577
    %579 = vmatmul.f32.gmra.mxu0 %v384
    %v580 = vpop.f32.mrf.mxu0
    %v581 = vadd.f32 0.0, %v580
    %582 = vmatmul.f32.gmra.mxu0 %v387
    %v583 = vpop.f32.mrf.mxu0
    %v584 = vadd.f32 0.0, %v583
    %585 = vmatmul.f32.gmra.mxu0 %v390
    %v586 = vpop.f32.mrf.mxu0
    %v587 = vadd.f32 0.0, %v586
    %588 = vmatmul.f32.gmra.mxu0 %v393
    %v589 = vpop.f32.mrf.mxu0
    %v590 = vadd.f32 0.0, %v589
    %591 = vmatmul.f32.gmra.mxu0 %v396
    %v592 = vpop.f32.mrf.mxu0
    %v593 = vadd.f32 0.0, %v592
    %594 = vmatmul.f32.gmra.mxu0 %v399
    %v595 = vpop.f32.mrf.mxu0
    %v596 = vadd.f32 0.0, %v595
    %597 = vmatmul.f32.gmra.mxu0 %v402
    %v598 = vpop.f32.mrf.mxu0
    %v599 = vadd.f32 0.0, %v598
    %600 = vmatmul.f32.gmra.mxu0 %v405
    %v601 = vpop.f32.mrf.mxu0
    %v602 = vadd.f32 0.0, %v601
    %603 = vmatmul.f32.gmra.mxu0 %v408
    %v604 = vpop.f32.mrf.mxu0
    %v605 = vadd.f32 0.0, %v604
    %606 = vmatmul.f32.gmra.mxu0 %v411
    %v607 = vpop.f32.mrf.mxu0
    %v608 = vadd.f32 0.0, %v607
    %609 = vmatmul.f32.gmra.mxu0 %v414
    %v610 = vpop.f32.mrf.mxu0
    %v611 = vadd.f32 0.0, %v610
    %612 = vmatmul.f32.gmra.mxu0 %v417
    %v613 = vpop.f32.mrf.mxu0
    %v614 = vadd.f32 0.0, %v613
    %615 = vmatmul.f32.gmra.mxu0 %v420
    %v616 = vpop.f32.mrf.mxu0
    %v617 = vadd.f32 0.0, %v616
    %618 = vmatmul.f32.gmra.mxu0 %v423
    %v619 = vpop.f32.mrf.mxu0
    %v620 = vadd.f32 0.0, %v619
    %621 = vmatmul.f32.gmra.mxu0 %v426
    %v622 = vpop.f32.mrf.mxu0
    %v623 = vadd.f32 0.0, %v622
    %624 = vmatmul.f32.gmra.mxu0 %v429
    %v625 = vpop.f32.mrf.mxu0
    %v626 = vadd.f32 0.0, %v625
    %627 = vmatmul.f32.gmra.mxu0 %v432
    %v628 = vpop.f32.mrf.mxu0
    %v629 = vadd.f32 0.0, %v628
    %630 = vmatmul.f32.gmra.mxu0 %v435
    %v631 = vpop.f32.mrf.mxu0
    %v632 = vadd.f32 0.0, %v631
    %633 = vmatmul.f32.gmra.mxu0 %v438
    %v634 = vpop.f32.mrf.mxu0
    %v635 = vadd.f32 0.0, %v634
    %636 = vmatmul.f32.gmra.mxu0 %v441
    %v637 = vpop.f32.mrf.mxu0
    %v638 = vadd.f32 0.0, %v637
    %639 = vmatmul.f32.gmra.mxu0 %v444
    %v640 = vpop.f32.mrf.mxu0
    %v641 = vadd.f32 0.0, %v640
    %642 = vmatmul.f32.gmra.mxu0 %v447
    %v643 = vpop.f32.mrf.mxu0
    %v644 = vadd.f32 0.0, %v643
    %645 = vmatmul.f32.gmra.mxu0 %v450
    %v646 = vpop.f32.mrf.mxu0
    %v647 = vadd.f32 0.0, %v646
    %648 = vmatmul.f32.gmra.mxu0 %v453
    %v649 = vpop.f32.mrf.mxu0
    %v650 = vadd.f32 0.0, %v649
    %651 = vmatmul.f32.gmra.mxu0 %v456
    %v652 = vpop.f32.mrf.mxu0
    %v653 = vadd.f32 0.0, %v652
    %654 = vmatmul.f32.gmra.mxu0 %v459
    %v655 = vpop.f32.mrf.mxu0
    %v656 = vadd.f32 0.0, %v655
    %657 = vmatmul.f32.gmra.mxu0 %v462
    %v658 = vpop.f32.mrf.mxu0
    %v659 = vadd.f32 0.0, %v658
    %660 = vmatmul.f32.gmra.mxu0 %v465
    %v661 = vpop.f32.mrf.mxu0
    %v662 = vadd.f32 0.0, %v661
    %663 = vmatmul.f32.gmra.mxu0 %v468
    %v664 = vpop.f32.mrf.mxu0
    %v665 = vadd.f32 0.0, %v664
    %666 = vmatmul.f32.gmra.mxu0 %v471
    %v667 = vpop.f32.mrf.mxu0
    %v668 = vadd.f32 0.0, %v667
    %669 = vmatmul.f32.gmra.mxu0 %v474
    %v670 = vpop.f32.mrf.mxu0
    %v671 = vadd.f32 0.0, %v670
    %672 = vmatmul.f32.gmra.mxu0 %v477
    %v673 = vpop.f32.mrf.mxu0
    %v674 = vadd.f32 0.0, %v673
    %675 = vmatmul.f32.gmra.mxu0 %v480
    %v676 = vpop.f32.mrf.mxu0
    %v677 = vadd.f32 0.0, %v676
    %678 = vmatmul.f32.gmra.mxu0 %v483
    %v679 = vpop.f32.mrf.mxu0
    %v680 = vadd.f32 0.0, %v679
    %681 = vmatmul.f32.gmra.mxu0 %v486
    %v682 = vpop.f32.mrf.mxu0
    %v683 = vadd.f32 0.0, %v682
    %684 = vmatmul.f32.gmra.mxu0 %v489
    %v685 = vpop.f32.mrf.mxu0
    %v686 = vadd.f32 0.0, %v685
    %687 = vmatmul.f32.gmra.mxu0 %v492
    %v688 = vpop.f32.mrf.mxu0
    %v689 = vadd.f32 0.0, %v688
    %690 = vmatmul.f32.gmra.mxu0 %v495
    %v691 = vpop.f32.mrf.mxu0
    %v692 = vadd.f32 0.0, %v691
    %693 = vdwg.mxu0
    %694 = vmatpush.msra.mxu0 0.0
    %695 = vmatpush.msra.mxu0 0.0
    %696 = vmatpush.msra.mxu0 0.0
    %697 = vmatpush.msra.mxu0 0.0
    %698 = vmatpush.msra.mxu0 0.0
    %699 = vmatpush.msra.mxu0 0.0
    %700 = vmatpush.msra.mxu0 %v250
    %701 = vmatpush.msra.mxu0 %v243
    %702 = vmatpush.msra.mxu0 %v236
    %703 = vmatpush.msra.mxu0 %v229
    %704 = vmatpush.msra.mxu0 %v222
    %705 = vmatpush.msra.mxu0 %v215
    %706 = vmatpush.msra.mxu0 %v208
    %707 = vmatpush.msra.mxu0 %v201
    %708 = vmatpush.msra.mxu0 %v194
    %709 = vmatpush.msra.mxu0 %v187
    %710 = vmatmul.f32.gmra.mxu0 %v318
    %v711 = vpop.f32.mrf.mxu0
    %v712 = vadd.f32 0.0, %v711
    %713 = vmatmul.f32.gmra.mxu0 %v321
    %v714 = vpop.f32.mrf.mxu0
    %v715 = vadd.f32 0.0, %v714
    %716 = vmatmul.f32.gmra.mxu0 %v324
    %v717 = vpop.f32.mrf.mxu0
    %v718 = vadd.f32 0.0, %v717
    %719 = vmatmul.f32.gmra.mxu0 %v327
    %v720 = vpop.f32.mrf.mxu0
    %v721 = vadd.f32 0.0, %v720
    %722 = vmatmul.f32.gmra.mxu0 %v330
    %v723 = vpop.f32.mrf.mxu0
    %v724 = vadd.f32 0.0, %v723
    %725 = vmatmul.f32.gmra.mxu0 %v333
    %v726 = vpop.f32.mrf.mxu0
    %v727 = vadd.f32 0.0, %v726
    %728 = vmatmul.f32.gmra.mxu0 %v336
    %v729 = vpop.f32.mrf.mxu0
    %v730 = vadd.f32 0.0, %v729
    %731 = vmatmul.f32.gmra.mxu0 %v339
    %v732 = vpop.f32.mrf.mxu0
    %v733 = vadd.f32 0.0, %v732
    %734 = vmatmul.f32.gmra.mxu0 %v342
    %v735 = vpop.f32.mrf.mxu0
    %v736 = vadd.f32 0.0, %v735
    %737 = vmatmul.f32.gmra.mxu0 %v345
    %v738 = vpop.f32.mrf.mxu0
    %v739 = vadd.f32 0.0, %v738
    %740 = vmatmul.f32.gmra.mxu0 %v348
    %v741 = vpop.f32.mrf.mxu0
    %v742 = vadd.f32 0.0, %v741
    %743 = vmatmul.f32.gmra.mxu0 %v351
    %v744 = vpop.f32.mrf.mxu0
    %v745 = vadd.f32 0.0, %v744
    %746 = vmatmul.f32.gmra.mxu0 %v354
    %v747 = vpop.f32.mrf.mxu0
    %v748 = vadd.f32 0.0, %v747
    %749 = vmatmul.f32.gmra.mxu0 %v357
    %v750 = vpop.f32.mrf.mxu0
    %v751 = vadd.f32 0.0, %v750
    %752 = vmatmul.f32.gmra.mxu0 %v360
    %v753 = vpop.f32.mrf.mxu0
    %v754 = vadd.f32 0.0, %v753
    %755 = vmatmul.f32.gmra.mxu0 %v363
    %v756 = vpop.f32.mrf.mxu0
    %v757 = vadd.f32 0.0, %v756
    %758 = vmatmul.f32.gmra.mxu0 %v366
    %v759 = vpop.f32.mrf.mxu0
    %v760 = vadd.f32 0.0, %v759
    %761 = vmatmul.f32.gmra.mxu0 %v369
    %v762 = vpop.f32.mrf.mxu0
    %v763 = vadd.f32 0.0, %v762
    %764 = vmatmul.f32.gmra.mxu0 %v372
    %v765 = vpop.f32.mrf.mxu0
    %v766 = vadd.f32 0.0, %v765
    %767 = vmatmul.f32.gmra.mxu0 %v375
    %v768 = vpop.f32.mrf.mxu0
    %v769 = vadd.f32 0.0, %v768
    %770 = vmatmul.f32.gmra.mxu0 %v378
    %v771 = vpop.f32.mrf.mxu0
    %v772 = vadd.f32 0.0, %v771
    %773 = vmatmul.f32.gmra.mxu0 %v381
    %v774 = vpop.f32.mrf.mxu0
    %v775 = vadd.f32 0.0, %v774
    %776 = vmatmul.f32.gmra.mxu0 %v384
    %v777 = vpop.f32.mrf.mxu0
    %v778 = vadd.f32 0.0, %v777
    %779 = vmatmul.f32.gmra.mxu0 %v387
    %v780 = vpop.f32.mrf.mxu0
    %v781 = vadd.f32 0.0, %v780
    %782 = vmatmul.f32.gmra.mxu0 %v390
    %v783 = vpop.f32.mrf.mxu0
    %v784 = vadd.f32 0.0, %v783
    %785 = vmatmul.f32.gmra.mxu0 %v393
    %v786 = vpop.f32.mrf.mxu0
    %v787 = vadd.f32 0.0, %v786
    %788 = vmatmul.f32.gmra.mxu0 %v396
    %v789 = vpop.f32.mrf.mxu0
    %v790 = vadd.f32 0.0, %v789
    %791 = vmatmul.f32.gmra.mxu0 %v399
    %v792 = vpop.f32.mrf.mxu0
    %v793 = vadd.f32 0.0, %v792
    %794 = vmatmul.f32.gmra.mxu0 %v402
    %v795 = vpop.f32.mrf.mxu0
    %v796 = vadd.f32 0.0, %v795
    %797 = vmatmul.f32.gmra.mxu0 %v405
    %v798 = vpop.f32.mrf.mxu0
    %v799 = vadd.f32 0.0, %v798
    %800 = vmatmul.f32.gmra.mxu0 %v408
    %v801 = vpop.f32.mrf.mxu0
    %v802 = vadd.f32 0.0, %v801
    %803 = vmatmul.f32.gmra.mxu0 %v411
    %v804 = vpop.f32.mrf.mxu0
    %v805 = vadd.f32 0.0, %v804
    %806 = vmatmul.f32.gmra.mxu0 %v414
    %v807 = vpop.f32.mrf.mxu0
    %v808 = vadd.f32 0.0, %v807
    %809 = vmatmul.f32.gmra.mxu0 %v417
    %v810 = vpop.f32.mrf.mxu0
    %v811 = vadd.f32 0.0, %v810
    %812 = vmatmul.f32.gmra.mxu0 %v420
    %v813 = vpop.f32.mrf.mxu0
    %v814 = vadd.f32 0.0, %v813
    %815 = vmatmul.f32.gmra.mxu0 %v423
    %v816 = vpop.f32.mrf.mxu0
    %v817 = vadd.f32 0.0, %v816
    %818 = vmatmul.f32.gmra.mxu0 %v426
    %v819 = vpop.f32.mrf.mxu0
    %v820 = vadd.f32 0.0, %v819
    %821 = vmatmul.f32.gmra.mxu0 %v429
    %v822 = vpop.f32.mrf.mxu0
    %v823 = vadd.f32 0.0, %v822
    %824 = vmatmul.f32.gmra.mxu0 %v432
    %v825 = vpop.f32.mrf.mxu0
    %v826 = vadd.f32 0.0, %v825
    %827 = vmatmul.f32.gmra.mxu0 %v435
    %v828 = vpop.f32.mrf.mxu0
    %v829 = vadd.f32 0.0, %v828
    %830 = vmatmul.f32.gmra.mxu0 %v438
    %v831 = vpop.f32.mrf.mxu0
    %v832 = vadd.f32 0.0, %v831
    %833 = vmatmul.f32.gmra.mxu0 %v441
    %v834 = vpop.f32.mrf.mxu0
    %v835 = vadd.f32 0.0, %v834
    %836 = vmatmul.f32.gmra.mxu0 %v444
    %v837 = vpop.f32.mrf.mxu0
    %v838 = vadd.f32 0.0, %v837
    %839 = vmatmul.f32.gmra.mxu0 %v447
    %v840 = vpop.f32.mrf.mxu0
    %v841 = vadd.f32 0.0, %v840
    %842 = vmatmul.f32.gmra.mxu0 %v450
    %v843 = vpop.f32.mrf.mxu0
    %v844 = vadd.f32 0.0, %v843
    %845 = vmatmul.f32.gmra.mxu0 %v453
    %v846 = vpop.f32.mrf.mxu0
    %v847 = vadd.f32 0.0, %v846
    %848 = vmatmul.f32.gmra.mxu0 %v456
    %v849 = vpop.f32.mrf.mxu0
    %v850 = vadd.f32 0.0, %v849
    %851 = vmatmul.f32.gmra.mxu0 %v459
    %v852 = vpop.f32.mrf.mxu0
    %v853 = vadd.f32 0.0, %v852
    %854 = vmatmul.f32.gmra.mxu0 %v462
    %v855 = vpop.f32.mrf.mxu0
    %v856 = vadd.f32 0.0, %v855
    %857 = vmatmul.f32.gmra.mxu0 %v465
    %v858 = vpop.f32.mrf.mxu0
    %v859 = vadd.f32 0.0, %v858
    %860 = vmatmul.f32.gmra.mxu0 %v468
    %v861 = vpop.f32.mrf.mxu0
    %v862 = vadd.f32 0.0, %v861
    %863 = vmatmul.f32.gmra.mxu0 %v471
    %v864 = vpop.f32.mrf.mxu0
    %v865 = vadd.f32 0.0, %v864
    %866 = vmatmul.f32.gmra.mxu0 %v474
    %v867 = vpop.f32.mrf.mxu0
    %v868 = vadd.f32 0.0, %v867
    %869 = vmatmul.f32.gmra.mxu0 %v477
    %v870 = vpop.f32.mrf.mxu0
    %v871 = vadd.f32 0.0, %v870
    %872 = vmatmul.f32.gmra.mxu0 %v480
    %v873 = vpop.f32.mrf.mxu0
    %v874 = vadd.f32 0.0, %v873
    %875 = vmatmul.f32.gmra.mxu0 %v483
    %v876 = vpop.f32.mrf.mxu0
    %v877 = vadd.f32 0.0, %v876
    %878 = vmatmul.f32.gmra.mxu0 %v486
    %v879 = vpop.f32.mrf.mxu0
    %v880 = vadd.f32 0.0, %v879
    %881 = vmatmul.f32.gmra.mxu0 %v489
    %v882 = vpop.f32.mrf.mxu0
    %v883 = vadd.f32 0.0, %v882
    %884 = vmatmul.f32.gmra.mxu0 %v492
    %v885 = vpop.f32.mrf.mxu0
    %v886 = vadd.f32 0.0, %v885
    %887 = vmatmul.f32.gmra.mxu0 %v495
    %v888 = vpop.f32.mrf.mxu0
    %v889 = vadd.f32 0.0, %v888
    %890 = vdwg.mxu0
    %891 = vmatpush.msra.mxu0 0.0
    %892 = vmatpush.msra.mxu0 0.0
    %893 = vmatpush.msra.mxu0 0.0
    %894 = vmatpush.msra.mxu0 0.0
    %895 = vmatpush.msra.mxu0 0.0
    %896 = vmatpush.msra.mxu0 0.0
    %897 = vmatpush.msra.mxu0 %v251
    %898 = vmatpush.msra.mxu0 %v244
    %899 = vmatpush.msra.mxu0 %v237
    %900 = vmatpush.msra.mxu0 %v230
    %901 = vmatpush.msra.mxu0 %v223
    %902 = vmatpush.msra.mxu0 %v216
    %903 = vmatpush.msra.mxu0 %v209
    %904 = vmatpush.msra.mxu0 %v202
    %905 = vmatpush.msra.mxu0 %v195
    %906 = vmatpush.msra.mxu0 %v188
    %907 = vmatmul.f32.gmra.mxu0 %v318
    %v908 = vpop.f32.mrf.mxu0
    %v909 = vadd.f32 0.0, %v908
    %910 = vmatmul.f32.gmra.mxu0 %v321
    %v911 = vpop.f32.mrf.mxu0
    %v912 = vadd.f32 0.0, %v911
    %913 = vmatmul.f32.gmra.mxu0 %v324
    %v914 = vpop.f32.mrf.mxu0
    %v915 = vadd.f32 0.0, %v914
    %916 = vmatmul.f32.gmra.mxu0 %v327
    %v917 = vpop.f32.mrf.mxu0
    %v918 = vadd.f32 0.0, %v917
    %919 = vmatmul.f32.gmra.mxu0 %v330
    %v920 = vpop.f32.mrf.mxu0
    %v921 = vadd.f32 0.0, %v920
    %922 = vmatmul.f32.gmra.mxu0 %v333
    %v923 = vpop.f32.mrf.mxu0
    %v924 = vadd.f32 0.0, %v923
    %925 = vmatmul.f32.gmra.mxu0 %v336
    %v926 = vpop.f32.mrf.mxu0
    %v927 = vadd.f32 0.0, %v926
    %928 = vmatmul.f32.gmra.mxu0 %v339
    %v929 = vpop.f32.mrf.mxu0
    %v930 = vadd.f32 0.0, %v929
    %931 = vmatmul.f32.gmra.mxu0 %v342
    %v932 = vpop.f32.mrf.mxu0
    %v933 = vadd.f32 0.0, %v932
    %934 = vmatmul.f32.gmra.mxu0 %v345
    %v935 = vpop.f32.mrf.mxu0
    %v936 = vadd.f32 0.0, %v935
    %937 = vmatmul.f32.gmra.mxu0 %v348
    %v938 = vpop.f32.mrf.mxu0
    %v939 = vadd.f32 0.0, %v938
    %940 = vmatmul.f32.gmra.mxu0 %v351
    %v941 = vpop.f32.mrf.mxu0
    %v942 = vadd.f32 0.0, %v941
    %943 = vmatmul.f32.gmra.mxu0 %v354
    %v944 = vpop.f32.mrf.mxu0
    %v945 = vadd.f32 0.0, %v944
    %946 = vmatmul.f32.gmra.mxu0 %v357
    %v947 = vpop.f32.mrf.mxu0
    %v948 = vadd.f32 0.0, %v947
    %949 = vmatmul.f32.gmra.mxu0 %v360
    %v950 = vpop.f32.mrf.mxu0
    %v951 = vadd.f32 0.0, %v950
    %952 = vmatmul.f32.gmra.mxu0 %v363
    %v953 = vpop.f32.mrf.mxu0
    %v954 = vadd.f32 0.0, %v953
    %955 = vmatmul.f32.gmra.mxu0 %v366
    %v956 = vpop.f32.mrf.mxu0
    %v957 = vadd.f32 0.0, %v956
    %958 = vmatmul.f32.gmra.mxu0 %v369
    %v959 = vpop.f32.mrf.mxu0
    %v960 = vadd.f32 0.0, %v959
    %961 = vmatmul.f32.gmra.mxu0 %v372
    %v962 = vpop.f32.mrf.mxu0
    %v963 = vadd.f32 0.0, %v962
    %964 = vmatmul.f32.gmra.mxu0 %v375
    %v965 = vpop.f32.mrf.mxu0
    %v966 = vadd.f32 0.0, %v965
    %967 = vmatmul.f32.gmra.mxu0 %v378
    %v968 = vpop.f32.mrf.mxu0
    %v969 = vadd.f32 0.0, %v968
    %970 = vmatmul.f32.gmra.mxu0 %v381
    %v971 = vpop.f32.mrf.mxu0
    %v972 = vadd.f32 0.0, %v971
    %973 = vmatmul.f32.gmra.mxu0 %v384
    %v974 = vpop.f32.mrf.mxu0
    %v975 = vadd.f32 0.0, %v974
    %976 = vmatmul.f32.gmra.mxu0 %v387
    %v977 = vpop.f32.mrf.mxu0
    %v978 = vadd.f32 0.0, %v977
    %979 = vmatmul.f32.gmra.mxu0 %v390
    %v980 = vpop.f32.mrf.mxu0
    %v981 = vadd.f32 0.0, %v980
    %982 = vmatmul.f32.gmra.mxu0 %v393
    %v983 = vpop.f32.mrf.mxu0
    %v984 = vadd.f32 0.0, %v983
    %985 = vmatmul.f32.gmra.mxu0 %v396
    %v986 = vpop.f32.mrf.mxu0
    %v987 = vadd.f32 0.0, %v986
    %988 = vmatmul.f32.gmra.mxu0 %v399
    %v989 = vpop.f32.mrf.mxu0
    %v990 = vadd.f32 0.0, %v989
    %991 = vmatmul.f32.gmra.mxu0 %v402
    %v992 = vpop.f32.mrf.mxu0
    %v993 = vadd.f32 0.0, %v992
    %994 = vmatmul.f32.gmra.mxu0 %v405
    %v995 = vpop.f32.mrf.mxu0
    %v996 = vadd.f32 0.0, %v995
    %997 = vmatmul.f32.gmra.mxu0 %v408
    %v998 = vpop.f32.mrf.mxu0
    %v999 = vadd.f32 0.0, %v998
    %1000 = vmatmul.f32.gmra.mxu0 %v411
    %v1001 = vpop.f32.mrf.mxu0
    %v1002 = vadd.f32 0.0, %v1001
    %1003 = vmatmul.f32.gmra.mxu0 %v414
    %v1004 = vpop.f32.mrf.mxu0
    %v1005 = vadd.f32 0.0, %v1004
    %1006 = vmatmul.f32.gmra.mxu0 %v417
    %v1007 = vpop.f32.mrf.mxu0
    %v1008 = vadd.f32 0.0, %v1007
    %1009 = vmatmul.f32.gmra.mxu0 %v420
    %v1010 = vpop.f32.mrf.mxu0
    %v1011 = vadd.f32 0.0, %v1010
    %1012 = vmatmul.f32.gmra.mxu0 %v423
    %v1013 = vpop.f32.mrf.mxu0
    %v1014 = vadd.f32 0.0, %v1013
    %1015 = vmatmul.f32.gmra.mxu0 %v426
    %v1016 = vpop.f32.mrf.mxu0
    %v1017 = vadd.f32 0.0, %v1016
    %1018 = vmatmul.f32.gmra.mxu0 %v429
    %v1019 = vpop.f32.mrf.mxu0
    %v1020 = vadd.f32 0.0, %v1019
    %1021 = vmatmul.f32.gmra.mxu0 %v432
    %v1022 = vpop.f32.mrf.mxu0
    %v1023 = vadd.f32 0.0, %v1022
    %1024 = vmatmul.f32.gmra.mxu0 %v435
    %v1025 = vpop.f32.mrf.mxu0
    %v1026 = vadd.f32 0.0, %v1025
    %1027 = vmatmul.f32.gmra.mxu0 %v438
    %v1028 = vpop.f32.mrf.mxu0
    %v1029 = vadd.f32 0.0, %v1028
    %1030 = vmatmul.f32.gmra.mxu0 %v441
    %v1031 = vpop.f32.mrf.mxu0
    %v1032 = vadd.f32 0.0, %v1031
    %1033 = vmatmul.f32.gmra.mxu0 %v444
    %v1034 = vpop.f32.mrf.mxu0
    %v1035 = vadd.f32 0.0, %v1034
    %1036 = vmatmul.f32.gmra.mxu0 %v447
    %v1037 = vpop.f32.mrf.mxu0
    %v1038 = vadd.f32 0.0, %v1037
    %1039 = vmatmul.f32.gmra.mxu0 %v450
    %v1040 = vpop.f32.mrf.mxu0
    %v1041 = vadd.f32 0.0, %v1040
    %1042 = vmatmul.f32.gmra.mxu0 %v453
    %v1043 = vpop.f32.mrf.mxu0
    %v1044 = vadd.f32 0.0, %v1043
    %1045 = vmatmul.f32.gmra.mxu0 %v456
    %v1046 = vpop.f32.mrf.mxu0
    %v1047 = vadd.f32 0.0, %v1046
    %1048 = vmatmul.f32.gmra.mxu0 %v459
    %v1049 = vpop.f32.mrf.mxu0
    %v1050 = vadd.f32 0.0, %v1049
    %1051 = vmatmul.f32.gmra.mxu0 %v462
    %v1052 = vpop.f32.mrf.mxu0
    %v1053 = vadd.f32 0.0, %v1052
    %1054 = vmatmul.f32.gmra.mxu0 %v465
    %v1055 = vpop.f32.mrf.mxu0
    %v1056 = vadd.f32 0.0, %v1055
    %1057 = vmatmul.f32.gmra.mxu0 %v468
    %v1058 = vpop.f32.mrf.mxu0
    %v1059 = vadd.f32 0.0, %v1058
    %1060 = vmatmul.f32.gmra.mxu0 %v471
    %v1061 = vpop.f32.mrf.mxu0
    %v1062 = vadd.f32 0.0, %v1061
    %1063 = vmatmul.f32.gmra.mxu0 %v474
    %v1064 = vpop.f32.mrf.mxu0
    %v1065 = vadd.f32 0.0, %v1064
    %1066 = vmatmul.f32.gmra.mxu0 %v477
    %v1067 = vpop.f32.mrf.mxu0
    %v1068 = vadd.f32 0.0, %v1067
    %1069 = vmatmul.f32.gmra.mxu0 %v480
    %v1070 = vpop.f32.mrf.mxu0
    %v1071 = vadd.f32 0.0, %v1070
    %1072 = vmatmul.f32.gmra.mxu0 %v483
    %v1073 = vpop.f32.mrf.mxu0
    %v1074 = vadd.f32 0.0, %v1073
    %1075 = vmatmul.f32.gmra.mxu0 %v486
    %v1076 = vpop.f32.mrf.mxu0
    %v1077 = vadd.f32 0.0, %v1076
    %1078 = vmatmul.f32.gmra.mxu0 %v489
    %v1079 = vpop.f32.mrf.mxu0
    %v1080 = vadd.f32 0.0, %v1079
    %1081 = vmatmul.f32.gmra.mxu0 %v492
    %v1082 = vpop.f32.mrf.mxu0
    %v1083 = vadd.f32 0.0, %v1082
    %1084 = vmatmul.f32.gmra.mxu0 %v495
    %v1085 = vpop.f32.mrf.mxu0
    %v1086 = vadd.f32 0.0, %v1085
    %1087 = vdwg.mxu0
    %1088 = vmatpush.msra.mxu0 0.0
    %1089 = vmatpush.msra.mxu0 0.0
    %1090 = vmatpush.msra.mxu0 0.0
    %1091 = vmatpush.msra.mxu0 0.0
    %1092 = vmatpush.msra.mxu0 0.0
    %1093 = vmatpush.msra.mxu0 0.0
    %1094 = vmatpush.msra.mxu0 %v252
    %1095 = vmatpush.msra.mxu0 %v245
    %1096 = vmatpush.msra.mxu0 %v238
    %1097 = vmatpush.msra.mxu0 %v231
    %1098 = vmatpush.msra.mxu0 %v224
    %1099 = vmatpush.msra.mxu0 %v217
    %1100 = vmatpush.msra.mxu0 %v210
    %1101 = vmatpush.msra.mxu0 %v203
    %1102 = vmatpush.msra.mxu0 %v196
    %1103 = vmatpush.msra.mxu0 %v189
    %1104 = vmatmul.f32.gmra.mxu0 %v318
    %v1105 = vpop.f32.mrf.mxu0
    %v1106 = vadd.f32 0.0, %v1105
    %1107 = vmatmul.f32.gmra.mxu0 %v321
    %v1108 = vpop.f32.mrf.mxu0
    %v1109 = vadd.f32 0.0, %v1108
    %1110 = vmatmul.f32.gmra.mxu0 %v324
    %v1111 = vpop.f32.mrf.mxu0
    %v1112 = vadd.f32 0.0, %v1111
    %1113 = vmatmul.f32.gmra.mxu0 %v327
    %v1114 = vpop.f32.mrf.mxu0
    %v1115 = vadd.f32 0.0, %v1114
    %1116 = vmatmul.f32.gmra.mxu0 %v330
    %v1117 = vpop.f32.mrf.mxu0
    %v1118 = vadd.f32 0.0, %v1117
    %1119 = vmatmul.f32.gmra.mxu0 %v333
    %v1120 = vpop.f32.mrf.mxu0
    %v1121 = vadd.f32 0.0, %v1120
    %1122 = vmatmul.f32.gmra.mxu0 %v336
    %v1123 = vpop.f32.mrf.mxu0
    %v1124 = vadd.f32 0.0, %v1123
    %1125 = vmatmul.f32.gmra.mxu0 %v339
    %v1126 = vpop.f32.mrf.mxu0
    %v1127 = vadd.f32 0.0, %v1126
    %1128 = vmatmul.f32.gmra.mxu0 %v342
    %v1129 = vpop.f32.mrf.mxu0
    %v1130 = vadd.f32 0.0, %v1129
    %1131 = vmatmul.f32.gmra.mxu0 %v345
    %v1132 = vpop.f32.mrf.mxu0
    %v1133 = vadd.f32 0.0, %v1132
    %1134 = vmatmul.f32.gmra.mxu0 %v348
    %v1135 = vpop.f32.mrf.mxu0
    %v1136 = vadd.f32 0.0, %v1135
    %1137 = vmatmul.f32.gmra.mxu0 %v351
    %v1138 = vpop.f32.mrf.mxu0
    %v1139 = vadd.f32 0.0, %v1138
    %1140 = vmatmul.f32.gmra.mxu0 %v354
    %v1141 = vpop.f32.mrf.mxu0
    %v1142 = vadd.f32 0.0, %v1141
    %1143 = vmatmul.f32.gmra.mxu0 %v357
    %v1144 = vpop.f32.mrf.mxu0
    %v1145 = vadd.f32 0.0, %v1144
    %1146 = vmatmul.f32.gmra.mxu0 %v360
    %v1147 = vpop.f32.mrf.mxu0
    %v1148 = vadd.f32 0.0, %v1147
    %1149 = vmatmul.f32.gmra.mxu0 %v363
    %v1150 = vpop.f32.mrf.mxu0
    %v1151 = vadd.f32 0.0, %v1150
    %1152 = vmatmul.f32.gmra.mxu0 %v366
    %v1153 = vpop.f32.mrf.mxu0
    %v1154 = vadd.f32 0.0, %v1153
    %1155 = vmatmul.f32.gmra.mxu0 %v369
    %v1156 = vpop.f32.mrf.mxu0
    %v1157 = vadd.f32 0.0, %v1156
    %1158 = vmatmul.f32.gmra.mxu0 %v372
    %v1159 = vpop.f32.mrf.mxu0
    %v1160 = vadd.f32 0.0, %v1159
    %1161 = vmatmul.f32.gmra.mxu0 %v375
    %v1162 = vpop.f32.mrf.mxu0
    %v1163 = vadd.f32 0.0, %v1162
    %1164 = vmatmul.f32.gmra.mxu0 %v378
    %v1165 = vpop.f32.mrf.mxu0
    %v1166 = vadd.f32 0.0, %v1165
    %1167 = vmatmul.f32.gmra.mxu0 %v381
    %v1168 = vpop.f32.mrf.mxu0
    %v1169 = vadd.f32 0.0, %v1168
    %1170 = vmatmul.f32.gmra.mxu0 %v384
    %v1171 = vpop.f32.mrf.mxu0
    %v1172 = vadd.f32 0.0, %v1171
    %1173 = vmatmul.f32.gmra.mxu0 %v387
    %v1174 = vpop.f32.mrf.mxu0
    %v1175 = vadd.f32 0.0, %v1174
    %1176 = vmatmul.f32.gmra.mxu0 %v390
    %v1177 = vpop.f32.mrf.mxu0
    %v1178 = vadd.f32 0.0, %v1177
    %1179 = vmatmul.f32.gmra.mxu0 %v393
    %v1180 = vpop.f32.mrf.mxu0
    %v1181 = vadd.f32 0.0, %v1180
    %1182 = vmatmul.f32.gmra.mxu0 %v396
    %v1183 = vpop.f32.mrf.mxu0
    %v1184 = vadd.f32 0.0, %v1183
    %1185 = vmatmul.f32.gmra.mxu0 %v399
    %v1186 = vpop.f32.mrf.mxu0
    %v1187 = vadd.f32 0.0, %v1186
    %1188 = vmatmul.f32.gmra.mxu0 %v402
    %v1189 = vpop.f32.mrf.mxu0
    %v1190 = vadd.f32 0.0, %v1189
    %1191 = vmatmul.f32.gmra.mxu0 %v405
    %v1192 = vpop.f32.mrf.mxu0
    %v1193 = vadd.f32 0.0, %v1192
    %1194 = vmatmul.f32.gmra.mxu0 %v408
    %v1195 = vpop.f32.mrf.mxu0
    %v1196 = vadd.f32 0.0, %v1195
    %1197 = vmatmul.f32.gmra.mxu0 %v411
    %v1198 = vpop.f32.mrf.mxu0
    %v1199 = vadd.f32 0.0, %v1198
    %1200 = vmatmul.f32.gmra.mxu0 %v414
    %v1201 = vpop.f32.mrf.mxu0
    %v1202 = vadd.f32 0.0, %v1201
    %1203 = vmatmul.f32.gmra.mxu0 %v417
    %v1204 = vpop.f32.mrf.mxu0
    %v1205 = vadd.f32 0.0, %v1204
    %1206 = vmatmul.f32.gmra.mxu0 %v420
    %v1207 = vpop.f32.mrf.mxu0
    %v1208 = vadd.f32 0.0, %v1207
    %1209 = vmatmul.f32.gmra.mxu0 %v423
    %v1210 = vpop.f32.mrf.mxu0
    %v1211 = vadd.f32 0.0, %v1210
    %1212 = vmatmul.f32.gmra.mxu0 %v426
    %v1213 = vpop.f32.mrf.mxu0
    %v1214 = vadd.f32 0.0, %v1213
    %1215 = vmatmul.f32.gmra.mxu0 %v429
    %v1216 = vpop.f32.mrf.mxu0
    %v1217 = vadd.f32 0.0, %v1216
    %1218 = vmatmul.f32.gmra.mxu0 %v432
    %v1219 = vpop.f32.mrf.mxu0
    %v1220 = vadd.f32 0.0, %v1219
    %1221 = vmatmul.f32.gmra.mxu0 %v435
    %v1222 = vpop.f32.mrf.mxu0
    %v1223 = vadd.f32 0.0, %v1222
    %1224 = vmatmul.f32.gmra.mxu0 %v438
    %v1225 = vpop.f32.mrf.mxu0
    %v1226 = vadd.f32 0.0, %v1225
    %1227 = vmatmul.f32.gmra.mxu0 %v441
    %v1228 = vpop.f32.mrf.mxu0
    %v1229 = vadd.f32 0.0, %v1228
    %1230 = vmatmul.f32.gmra.mxu0 %v444
    %v1231 = vpop.f32.mrf.mxu0
    %v1232 = vadd.f32 0.0, %v1231
    %1233 = vmatmul.f32.gmra.mxu0 %v447
    %v1234 = vpop.f32.mrf.mxu0
    %v1235 = vadd.f32 0.0, %v1234
    %1236 = vmatmul.f32.gmra.mxu0 %v450
    %v1237 = vpop.f32.mrf.mxu0
    %v1238 = vadd.f32 0.0, %v1237
    %1239 = vmatmul.f32.gmra.mxu0 %v453
    %v1240 = vpop.f32.mrf.mxu0
    %v1241 = vadd.f32 0.0, %v1240
    %1242 = vmatmul.f32.gmra.mxu0 %v456
    %v1243 = vpop.f32.mrf.mxu0
    %v1244 = vadd.f32 0.0, %v1243
    %1245 = vmatmul.f32.gmra.mxu0 %v459
    %v1246 = vpop.f32.mrf.mxu0
    %v1247 = vadd.f32 0.0, %v1246
    %1248 = vmatmul.f32.gmra.mxu0 %v462
    %v1249 = vpop.f32.mrf.mxu0
    %v1250 = vadd.f32 0.0, %v1249
    %1251 = vmatmul.f32.gmra.mxu0 %v465
    %v1252 = vpop.f32.mrf.mxu0
    %v1253 = vadd.f32 0.0, %v1252
    %1254 = vmatmul.f32.gmra.mxu0 %v468
    %v1255 = vpop.f32.mrf.mxu0
    %v1256 = vadd.f32 0.0, %v1255
    %1257 = vmatmul.f32.gmra.mxu0 %v471
    %v1258 = vpop.f32.mrf.mxu0
    %v1259 = vadd.f32 0.0, %v1258
    %1260 = vmatmul.f32.gmra.mxu0 %v474
    %v1261 = vpop.f32.mrf.mxu0
    %v1262 = vadd.f32 0.0, %v1261
    %1263 = vmatmul.f32.gmra.mxu0 %v477
    %v1264 = vpop.f32.mrf.mxu0
    %v1265 = vadd.f32 0.0, %v1264
    %1266 = vmatmul.f32.gmra.mxu0 %v480
    %v1267 = vpop.f32.mrf.mxu0
    %v1268 = vadd.f32 0.0, %v1267
    %1269 = vmatmul.f32.gmra.mxu0 %v483
    %v1270 = vpop.f32.mrf.mxu0
    %v1271 = vadd.f32 0.0, %v1270
    %1272 = vmatmul.f32.gmra.mxu0 %v486
    %v1273 = vpop.f32.mrf.mxu0
    %v1274 = vadd.f32 0.0, %v1273
    %1275 = vmatmul.f32.gmra.mxu0 %v489
    %v1276 = vpop.f32.mrf.mxu0
    %v1277 = vadd.f32 0.0, %v1276
    %1278 = vmatmul.f32.gmra.mxu0 %v492
    %v1279 = vpop.f32.mrf.mxu0
    %v1280 = vadd.f32 0.0, %v1279
    %1281 = vmatmul.f32.gmra.mxu0 %v495
    %v1282 = vpop.f32.mrf.mxu0
    %v1283 = vadd.f32 0.0, %v1282
    %1284 = vdwg.mxu0
    %1285 = vmatpush.msra.mxu0 0.0
    %1286 = vmatpush.msra.mxu0 0.0
    %1287 = vmatpush.msra.mxu0 0.0
    %1288 = vmatpush.msra.mxu0 0.0
    %1289 = vmatpush.msra.mxu0 0.0
    %1290 = vmatpush.msra.mxu0 0.0
    %1291 = vmatpush.msra.mxu0 %v253
    %1292 = vmatpush.msra.mxu0 %v246
    %1293 = vmatpush.msra.mxu0 %v239
    %1294 = vmatpush.msra.mxu0 %v232
    %1295 = vmatpush.msra.mxu0 %v225
    %1296 = vmatpush.msra.mxu0 %v218
    %1297 = vmatpush.msra.mxu0 %v211
    %1298 = vmatpush.msra.mxu0 %v204
    %1299 = vmatpush.msra.mxu0 %v197
    %1300 = vmatpush.msra.mxu0 %v190
    %1301 = vmatmul.f32.gmra.mxu0 %v318
    %v1302 = vpop.f32.mrf.mxu0
    %v1303 = vadd.f32 0.0, %v1302
    %1304 = vmatmul.f32.gmra.mxu0 %v321
    %v1305 = vpop.f32.mrf.mxu0
    %v1306 = vadd.f32 0.0, %v1305
    %1307 = vmatmul.f32.gmra.mxu0 %v324
    %v1308 = vpop.f32.mrf.mxu0
    %v1309 = vadd.f32 0.0, %v1308
    %1310 = vmatmul.f32.gmra.mxu0 %v327
    %v1311 = vpop.f32.mrf.mxu0
    %v1312 = vadd.f32 0.0, %v1311
    %1313 = vmatmul.f32.gmra.mxu0 %v330
    %v1314 = vpop.f32.mrf.mxu0
    %v1315 = vadd.f32 0.0, %v1314
    %1316 = vmatmul.f32.gmra.mxu0 %v333
    %v1317 = vpop.f32.mrf.mxu0
    %v1318 = vadd.f32 0.0, %v1317
    %1319 = vmatmul.f32.gmra.mxu0 %v336
    %v1320 = vpop.f32.mrf.mxu0
    %v1321 = vadd.f32 0.0, %v1320
    %1322 = vmatmul.f32.gmra.mxu0 %v339
    %v1323 = vpop.f32.mrf.mxu0
    %v1324 = vadd.f32 0.0, %v1323
    %1325 = vmatmul.f32.gmra.mxu0 %v342
    %v1326 = vpop.f32.mrf.mxu0
    %v1327 = vadd.f32 0.0, %v1326
    %1328 = vmatmul.f32.gmra.mxu0 %v345
    %v1329 = vpop.f32.mrf.mxu0
    %v1330 = vadd.f32 0.0, %v1329
    %1331 = vmatmul.f32.gmra.mxu0 %v348
    %v1332 = vpop.f32.mrf.mxu0
    %v1333 = vadd.f32 0.0, %v1332
    %1334 = vmatmul.f32.gmra.mxu0 %v351
    %v1335 = vpop.f32.mrf.mxu0
    %v1336 = vadd.f32 0.0, %v1335
    %1337 = vmatmul.f32.gmra.mxu0 %v354
    %v1338 = vpop.f32.mrf.mxu0
    %v1339 = vadd.f32 0.0, %v1338
    %1340 = vmatmul.f32.gmra.mxu0 %v357
    %v1341 = vpop.f32.mrf.mxu0
    %v1342 = vadd.f32 0.0, %v1341
    %1343 = vmatmul.f32.gmra.mxu0 %v360
    %v1344 = vpop.f32.mrf.mxu0
    %v1345 = vadd.f32 0.0, %v1344
    %1346 = vmatmul.f32.gmra.mxu0 %v363
    %v1347 = vpop.f32.mrf.mxu0
    %v1348 = vadd.f32 0.0, %v1347
    %1349 = vmatmul.f32.gmra.mxu0 %v366
    %v1350 = vpop.f32.mrf.mxu0
    %v1351 = vadd.f32 0.0, %v1350
    %1352 = vmatmul.f32.gmra.mxu0 %v369
    %v1353 = vpop.f32.mrf.mxu0
    %v1354 = vadd.f32 0.0, %v1353
    %1355 = vmatmul.f32.gmra.mxu0 %v372
    %v1356 = vpop.f32.mrf.mxu0
    %v1357 = vadd.f32 0.0, %v1356
    %1358 = vmatmul.f32.gmra.mxu0 %v375
    %v1359 = vpop.f32.mrf.mxu0
    %v1360 = vadd.f32 0.0, %v1359
    %1361 = vmatmul.f32.gmra.mxu0 %v378
    %v1362 = vpop.f32.mrf.mxu0
    %v1363 = vadd.f32 0.0, %v1362
    %1364 = vmatmul.f32.gmra.mxu0 %v381
    %v1365 = vpop.f32.mrf.mxu0
    %v1366 = vadd.f32 0.0, %v1365
    %1367 = vmatmul.f32.gmra.mxu0 %v384
    %v1368 = vpop.f32.mrf.mxu0
    %v1369 = vadd.f32 0.0, %v1368
    %1370 = vmatmul.f32.gmra.mxu0 %v387
    %v1371 = vpop.f32.mrf.mxu0
    %v1372 = vadd.f32 0.0, %v1371
    %1373 = vmatmul.f32.gmra.mxu0 %v390
    %v1374 = vpop.f32.mrf.mxu0
    %v1375 = vadd.f32 0.0, %v1374
    %1376 = vmatmul.f32.gmra.mxu0 %v393
    %v1377 = vpop.f32.mrf.mxu0
    %v1378 = vadd.f32 0.0, %v1377
    %1379 = vmatmul.f32.gmra.mxu0 %v396
    %v1380 = vpop.f32.mrf.mxu0
    %v1381 = vadd.f32 0.0, %v1380
    %1382 = vmatmul.f32.gmra.mxu0 %v399
    %v1383 = vpop.f32.mrf.mxu0
    %v1384 = vadd.f32 0.0, %v1383
    %1385 = vmatmul.f32.gmra.mxu0 %v402
    %v1386 = vpop.f32.mrf.mxu0
    %v1387 = vadd.f32 0.0, %v1386
    %1388 = vmatmul.f32.gmra.mxu0 %v405
    %v1389 = vpop.f32.mrf.mxu0
    %v1390 = vadd.f32 0.0, %v1389
    %1391 = vmatmul.f32.gmra.mxu0 %v408
    %v1392 = vpop.f32.mrf.mxu0
    %v1393 = vadd.f32 0.0, %v1392
    %1394 = vmatmul.f32.gmra.mxu0 %v411
    %v1395 = vpop.f32.mrf.mxu0
    %v1396 = vadd.f32 0.0, %v1395
    %1397 = vmatmul.f32.gmra.mxu0 %v414
    %v1398 = vpop.f32.mrf.mxu0
    %v1399 = vadd.f32 0.0, %v1398
    %1400 = vmatmul.f32.gmra.mxu0 %v417
    %v1401 = vpop.f32.mrf.mxu0
    %v1402 = vadd.f32 0.0, %v1401
    %1403 = vmatmul.f32.gmra.mxu0 %v420
    %v1404 = vpop.f32.mrf.mxu0
    %v1405 = vadd.f32 0.0, %v1404
    %1406 = vmatmul.f32.gmra.mxu0 %v423
    %v1407 = vpop.f32.mrf.mxu0
    %v1408 = vadd.f32 0.0, %v1407
    %1409 = vmatmul.f32.gmra.mxu0 %v426
    %v1410 = vpop.f32.mrf.mxu0
    %v1411 = vadd.f32 0.0, %v1410
    %1412 = vmatmul.f32.gmra.mxu0 %v429
    %v1413 = vpop.f32.mrf.mxu0
    %v1414 = vadd.f32 0.0, %v1413
    %1415 = vmatmul.f32.gmra.mxu0 %v432
    %v1416 = vpop.f32.mrf.mxu0
    %v1417 = vadd.f32 0.0, %v1416
    %1418 = vmatmul.f32.gmra.mxu0 %v435
    %v1419 = vpop.f32.mrf.mxu0
    %v1420 = vadd.f32 0.0, %v1419
    %1421 = vmatmul.f32.gmra.mxu0 %v438
    %v1422 = vpop.f32.mrf.mxu0
    %v1423 = vadd.f32 0.0, %v1422
    %1424 = vmatmul.f32.gmra.mxu0 %v441
    %v1425 = vpop.f32.mrf.mxu0
    %v1426 = vadd.f32 0.0, %v1425
    %1427 = vmatmul.f32.gmra.mxu0 %v444
    %v1428 = vpop.f32.mrf.mxu0
    %v1429 = vadd.f32 0.0, %v1428
    %1430 = vmatmul.f32.gmra.mxu0 %v447
    %v1431 = vpop.f32.mrf.mxu0
    %v1432 = vadd.f32 0.0, %v1431
    %1433 = vmatmul.f32.gmra.mxu0 %v450
    %v1434 = vpop.f32.mrf.mxu0
    %v1435 = vadd.f32 0.0, %v1434
    %1436 = vmatmul.f32.gmra.mxu0 %v453
    %v1437 = vpop.f32.mrf.mxu0
    %v1438 = vadd.f32 0.0, %v1437
    %1439 = vmatmul.f32.gmra.mxu0 %v456
    %v1440 = vpop.f32.mrf.mxu0
    %v1441 = vadd.f32 0.0, %v1440
    %1442 = vmatmul.f32.gmra.mxu0 %v459
    %v1443 = vpop.f32.mrf.mxu0
    %v1444 = vadd.f32 0.0, %v1443
    %1445 = vmatmul.f32.gmra.mxu0 %v462
    %v1446 = vpop.f32.mrf.mxu0
    %v1447 = vadd.f32 0.0, %v1446
    %1448 = vmatmul.f32.gmra.mxu0 %v465
    %v1449 = vpop.f32.mrf.mxu0
    %v1450 = vadd.f32 0.0, %v1449
    %1451 = vmatmul.f32.gmra.mxu0 %v468
    %v1452 = vpop.f32.mrf.mxu0
    %v1453 = vadd.f32 0.0, %v1452
    %1454 = vmatmul.f32.gmra.mxu0 %v471
    %v1455 = vpop.f32.mrf.mxu0
    %v1456 = vadd.f32 0.0, %v1455
    %1457 = vmatmul.f32.gmra.mxu0 %v474
    %v1458 = vpop.f32.mrf.mxu0
    %v1459 = vadd.f32 0.0, %v1458
    %1460 = vmatmul.f32.gmra.mxu0 %v477
    %v1461 = vpop.f32.mrf.mxu0
    %v1462 = vadd.f32 0.0, %v1461
    %1463 = vmatmul.f32.gmra.mxu0 %v480
    %v1464 = vpop.f32.mrf.mxu0
    %v1465 = vadd.f32 0.0, %v1464
    %1466 = vmatmul.f32.gmra.mxu0 %v483
    %v1467 = vpop.f32.mrf.mxu0
    %v1468 = vadd.f32 0.0, %v1467
    %1469 = vmatmul.f32.gmra.mxu0 %v486
    %v1470 = vpop.f32.mrf.mxu0
    %v1471 = vadd.f32 0.0, %v1470
    %1472 = vmatmul.f32.gmra.mxu0 %v489
    %v1473 = vpop.f32.mrf.mxu0
    %v1474 = vadd.f32 0.0, %v1473
    %1475 = vmatmul.f32.gmra.mxu0 %v492
    %v1476 = vpop.f32.mrf.mxu0
    %v1477 = vadd.f32 0.0, %v1476
    %1478 = vmatmul.f32.gmra.mxu0 %v495
    %v1479 = vpop.f32.mrf.mxu0
    %v1480 = vadd.f32 0.0, %v1479
    %1481 = vdwg.mxu0
    %1482 = vmatpush.msra.mxu0 0.0
    %1483 = vmatpush.msra.mxu0 0.0
    %1484 = vmatpush.msra.mxu0 0.0
    %1485 = vmatpush.msra.mxu0 0.0
    %1486 = vmatpush.msra.mxu0 0.0
    %1487 = vmatpush.msra.mxu0 0.0
    %1488 = vmatpush.msra.mxu0 %v254
    %1489 = vmatpush.msra.mxu0 %v247
    %1490 = vmatpush.msra.mxu0 %v240
    %1491 = vmatpush.msra.mxu0 %v233
    %1492 = vmatpush.msra.mxu0 %v226
    %1493 = vmatpush.msra.mxu0 %v219
    %1494 = vmatpush.msra.mxu0 %v212
    %1495 = vmatpush.msra.mxu0 %v205
    %1496 = vmatpush.msra.mxu0 %v198
    %1497 = vmatpush.msra.mxu0 %v191
    %1498 = vmatmul.f32.gmra.mxu0 %v318
    %v1499 = vpop.f32.mrf.mxu0
    %v1500 = vadd.f32 0.0, %v1499
    %1501 = vmatmul.f32.gmra.mxu0 %v321
    %v1502 = vpop.f32.mrf.mxu0
    %v1503 = vadd.f32 0.0, %v1502
    %1504 = vmatmul.f32.gmra.mxu0 %v324
    %v1505 = vpop.f32.mrf.mxu0
    %v1506 = vadd.f32 0.0, %v1505
    %1507 = vmatmul.f32.gmra.mxu0 %v327
    %v1508 = vpop.f32.mrf.mxu0
    %v1509 = vadd.f32 0.0, %v1508
    %1510 = vmatmul.f32.gmra.mxu0 %v330
    %v1511 = vpop.f32.mrf.mxu0
    %v1512 = vadd.f32 0.0, %v1511
    %1513 = vmatmul.f32.gmra.mxu0 %v333
    %v1514 = vpop.f32.mrf.mxu0
    %v1515 = vadd.f32 0.0, %v1514
    %1516 = vmatmul.f32.gmra.mxu0 %v336
    %v1517 = vpop.f32.mrf.mxu0
    %v1518 = vadd.f32 0.0, %v1517
    %1519 = vmatmul.f32.gmra.mxu0 %v339
    %v1520 = vpop.f32.mrf.mxu0
    %v1521 = vadd.f32 0.0, %v1520
    %1522 = vmatmul.f32.gmra.mxu0 %v342
    %v1523 = vpop.f32.mrf.mxu0
    %v1524 = vadd.f32 0.0, %v1523
    %1525 = vmatmul.f32.gmra.mxu0 %v345
    %v1526 = vpop.f32.mrf.mxu0
    %v1527 = vadd.f32 0.0, %v1526
    %1528 = vmatmul.f32.gmra.mxu0 %v348
    %v1529 = vpop.f32.mrf.mxu0
    %v1530 = vadd.f32 0.0, %v1529
    %1531 = vmatmul.f32.gmra.mxu0 %v351
    %v1532 = vpop.f32.mrf.mxu0
    %v1533 = vadd.f32 0.0, %v1532
    %1534 = vmatmul.f32.gmra.mxu0 %v354
    %v1535 = vpop.f32.mrf.mxu0
    %v1536 = vadd.f32 0.0, %v1535
    %1537 = vmatmul.f32.gmra.mxu0 %v357
    %v1538 = vpop.f32.mrf.mxu0
    %v1539 = vadd.f32 0.0, %v1538
    %1540 = vmatmul.f32.gmra.mxu0 %v360
    %v1541 = vpop.f32.mrf.mxu0
    %v1542 = vadd.f32 0.0, %v1541
    %1543 = vmatmul.f32.gmra.mxu0 %v363
    %v1544 = vpop.f32.mrf.mxu0
    %v1545 = vadd.f32 0.0, %v1544
    %1546 = vmatmul.f32.gmra.mxu0 %v366
    %v1547 = vpop.f32.mrf.mxu0
    %v1548 = vadd.f32 0.0, %v1547
    %1549 = vmatmul.f32.gmra.mxu0 %v369
    %v1550 = vpop.f32.mrf.mxu0
    %v1551 = vadd.f32 0.0, %v1550
    %1552 = vmatmul.f32.gmra.mxu0 %v372
    %v1553 = vpop.f32.mrf.mxu0
    %v1554 = vadd.f32 0.0, %v1553
    %1555 = vmatmul.f32.gmra.mxu0 %v375
    %v1556 = vpop.f32.mrf.mxu0
    %v1557 = vadd.f32 0.0, %v1556
    %1558 = vmatmul.f32.gmra.mxu0 %v378
    %v1559 = vpop.f32.mrf.mxu0
    %v1560 = vadd.f32 0.0, %v1559
    %1561 = vmatmul.f32.gmra.mxu0 %v381
    %v1562 = vpop.f32.mrf.mxu0
    %v1563 = vadd.f32 0.0, %v1562
    %1564 = vmatmul.f32.gmra.mxu0 %v384
    %v1565 = vpop.f32.mrf.mxu0
    %v1566 = vadd.f32 0.0, %v1565
    %1567 = vmatmul.f32.gmra.mxu0 %v387
    %v1568 = vpop.f32.mrf.mxu0
    %v1569 = vadd.f32 0.0, %v1568
    %1570 = vmatmul.f32.gmra.mxu0 %v390
    %v1571 = vpop.f32.mrf.mxu0
    %v1572 = vadd.f32 0.0, %v1571
    %1573 = vmatmul.f32.gmra.mxu0 %v393
    %v1574 = vpop.f32.mrf.mxu0
    %v1575 = vadd.f32 0.0, %v1574
    %1576 = vmatmul.f32.gmra.mxu0 %v396
    %v1577 = vpop.f32.mrf.mxu0
    %v1578 = vadd.f32 0.0, %v1577
    %1579 = vmatmul.f32.gmra.mxu0 %v399
    %v1580 = vpop.f32.mrf.mxu0
    %v1581 = vadd.f32 0.0, %v1580
    %1582 = vmatmul.f32.gmra.mxu0 %v402
    %v1583 = vpop.f32.mrf.mxu0
    %v1584 = vadd.f32 0.0, %v1583
    %1585 = vmatmul.f32.gmra.mxu0 %v405
    %v1586 = vpop.f32.mrf.mxu0
    %v1587 = vadd.f32 0.0, %v1586
    %1588 = vmatmul.f32.gmra.mxu0 %v408
    %v1589 = vpop.f32.mrf.mxu0
    %v1590 = vadd.f32 0.0, %v1589
    %1591 = vmatmul.f32.gmra.mxu0 %v411
    %v1592 = vpop.f32.mrf.mxu0
    %v1593 = vadd.f32 0.0, %v1592
    %1594 = vmatmul.f32.gmra.mxu0 %v414
    %v1595 = vpop.f32.mrf.mxu0
    %v1596 = vadd.f32 0.0, %v1595
    %1597 = vmatmul.f32.gmra.mxu0 %v417
    %v1598 = vpop.f32.mrf.mxu0
    %v1599 = vadd.f32 0.0, %v1598
    %1600 = vmatmul.f32.gmra.mxu0 %v420
    %v1601 = vpop.f32.mrf.mxu0
    %v1602 = vadd.f32 0.0, %v1601
    %1603 = vmatmul.f32.gmra.mxu0 %v423
    %v1604 = vpop.f32.mrf.mxu0
    %v1605 = vadd.f32 0.0, %v1604
    %1606 = vmatmul.f32.gmra.mxu0 %v426
    %v1607 = vpop.f32.mrf.mxu0
    %v1608 = vadd.f32 0.0, %v1607
    %1609 = vmatmul.f32.gmra.mxu0 %v429
    %v1610 = vpop.f32.mrf.mxu0
    %v1611 = vadd.f32 0.0, %v1610
    %1612 = vmatmul.f32.gmra.mxu0 %v432
    %v1613 = vpop.f32.mrf.mxu0
    %v1614 = vadd.f32 0.0, %v1613
    %1615 = vmatmul.f32.gmra.mxu0 %v435
    %v1616 = vpop.f32.mrf.mxu0
    %v1617 = vadd.f32 0.0, %v1616
    %1618 = vmatmul.f32.gmra.mxu0 %v438
    %v1619 = vpop.f32.mrf.mxu0
    %v1620 = vadd.f32 0.0, %v1619
    %1621 = vmatmul.f32.gmra.mxu0 %v441
    %v1622 = vpop.f32.mrf.mxu0
    %v1623 = vadd.f32 0.0, %v1622
    %1624 = vmatmul.f32.gmra.mxu0 %v444
    %v1625 = vpop.f32.mrf.mxu0
    %v1626 = vadd.f32 0.0, %v1625
    %1627 = vmatmul.f32.gmra.mxu0 %v447
    %v1628 = vpop.f32.mrf.mxu0
    %v1629 = vadd.f32 0.0, %v1628
    %1630 = vmatmul.f32.gmra.mxu0 %v450
    %v1631 = vpop.f32.mrf.mxu0
    %v1632 = vadd.f32 0.0, %v1631
    %1633 = vmatmul.f32.gmra.mxu0 %v453
    %v1634 = vpop.f32.mrf.mxu0
    %v1635 = vadd.f32 0.0, %v1634
    %1636 = vmatmul.f32.gmra.mxu0 %v456
    %v1637 = vpop.f32.mrf.mxu0
    %v1638 = vadd.f32 0.0, %v1637
    %1639 = vmatmul.f32.gmra.mxu0 %v459
    %v1640 = vpop.f32.mrf.mxu0
    %v1641 = vadd.f32 0.0, %v1640
    %1642 = vmatmul.f32.gmra.mxu0 %v462
    %v1643 = vpop.f32.mrf.mxu0
    %v1644 = vadd.f32 0.0, %v1643
    %1645 = vmatmul.f32.gmra.mxu0 %v465
    %v1646 = vpop.f32.mrf.mxu0
    %v1647 = vadd.f32 0.0, %v1646
    %1648 = vmatmul.f32.gmra.mxu0 %v468
    %v1649 = vpop.f32.mrf.mxu0
    %v1650 = vadd.f32 0.0, %v1649
    %1651 = vmatmul.f32.gmra.mxu0 %v471
    %v1652 = vpop.f32.mrf.mxu0
    %v1653 = vadd.f32 0.0, %v1652
    %1654 = vmatmul.f32.gmra.mxu0 %v474
    %v1655 = vpop.f32.mrf.mxu0
    %v1656 = vadd.f32 0.0, %v1655
    %1657 = vmatmul.f32.gmra.mxu0 %v477
    %v1658 = vpop.f32.mrf.mxu0
    %v1659 = vadd.f32 0.0, %v1658
    %1660 = vmatmul.f32.gmra.mxu0 %v480
    %v1661 = vpop.f32.mrf.mxu0
    %v1662 = vadd.f32 0.0, %v1661
    %1663 = vmatmul.f32.gmra.mxu0 %v483
    %v1664 = vpop.f32.mrf.mxu0
    %v1665 = vadd.f32 0.0, %v1664
    %1666 = vmatmul.f32.gmra.mxu0 %v486
    %v1667 = vpop.f32.mrf.mxu0
    %v1668 = vadd.f32 0.0, %v1667
    %1669 = vmatmul.f32.gmra.mxu0 %v489
    %v1670 = vpop.f32.mrf.mxu0
    %v1671 = vadd.f32 0.0, %v1670
    %1672 = vmatmul.f32.gmra.mxu0 %v492
    %v1673 = vpop.f32.mrf.mxu0
    %v1674 = vadd.f32 0.0, %v1673
    %1675 = vmatmul.f32.gmra.mxu0 %v495
    %v1676 = vpop.f32.mrf.mxu0
    %v1677 = vadd.f32 0.0, %v1676
    %1678 = vdwg.mxu0
    %1679 = vmatpush.msra.mxu0 0.0
    %1680 = vmatpush.msra.mxu0 0.0
    %1681 = vmatpush.msra.mxu0 0.0
    %1682 = vmatpush.msra.mxu0 0.0
    %1683 = vmatpush.msra.mxu0 0.0
    %1684 = vmatpush.msra.mxu0 0.0
    %1685 = vmatpush.msra.mxu0 %v255
    %1686 = vmatpush.msra.mxu0 %v248
    %1687 = vmatpush.msra.mxu0 %v241
    %1688 = vmatpush.msra.mxu0 %v234
    %1689 = vmatpush.msra.mxu0 %v227
    %1690 = vmatpush.msra.mxu0 %v220
    %1691 = vmatpush.msra.mxu0 %v213
    %1692 = vmatpush.msra.mxu0 %v206
    %1693 = vmatpush.msra.mxu0 %v199
    %1694 = vmatpush.msra.mxu0 %v192
    %1695 = vmatmul.f32.gmra.mxu0 %v318
    %v1696 = vpop.f32.mrf.mxu0
    %v1697 = vadd.f32 0.0, %v1696
    %1698 = vmatmul.f32.gmra.mxu0 %v321
    %v1699 = vpop.f32.mrf.mxu0
    %v1700 = vadd.f32 0.0, %v1699
    %1701 = vmatmul.f32.gmra.mxu0 %v324
    %v1702 = vpop.f32.mrf.mxu0
    %v1703 = vadd.f32 0.0, %v1702
    %1704 = vmatmul.f32.gmra.mxu0 %v327
    %v1705 = vpop.f32.mrf.mxu0
    %v1706 = vadd.f32 0.0, %v1705
    %1707 = vmatmul.f32.gmra.mxu0 %v330
    %v1708 = vpop.f32.mrf.mxu0
    %v1709 = vadd.f32 0.0, %v1708
    %1710 = vmatmul.f32.gmra.mxu0 %v333
    %v1711 = vpop.f32.mrf.mxu0
    %v1712 = vadd.f32 0.0, %v1711
    %1713 = vmatmul.f32.gmra.mxu0 %v336
    %v1714 = vpop.f32.mrf.mxu0
    %v1715 = vadd.f32 0.0, %v1714
    %1716 = vmatmul.f32.gmra.mxu0 %v339
    %v1717 = vpop.f32.mrf.mxu0
    %v1718 = vadd.f32 0.0, %v1717
    %1719 = vmatmul.f32.gmra.mxu0 %v342
    %v1720 = vpop.f32.mrf.mxu0
    %v1721 = vadd.f32 0.0, %v1720
    %1722 = vmatmul.f32.gmra.mxu0 %v345
    %v1723 = vpop.f32.mrf.mxu0
    %v1724 = vadd.f32 0.0, %v1723
    %1725 = vmatmul.f32.gmra.mxu0 %v348
    %v1726 = vpop.f32.mrf.mxu0
    %v1727 = vadd.f32 0.0, %v1726
    %1728 = vmatmul.f32.gmra.mxu0 %v351
    %v1729 = vpop.f32.mrf.mxu0
    %v1730 = vadd.f32 0.0, %v1729
    %1731 = vmatmul.f32.gmra.mxu0 %v354
    %v1732 = vpop.f32.mrf.mxu0
    %v1733 = vadd.f32 0.0, %v1732
    %1734 = vmatmul.f32.gmra.mxu0 %v357
    %v1735 = vpop.f32.mrf.mxu0
    %v1736 = vadd.f32 0.0, %v1735
    %1737 = vmatmul.f32.gmra.mxu0 %v360
    %v1738 = vpop.f32.mrf.mxu0
    %v1739 = vadd.f32 0.0, %v1738
    %1740 = vmatmul.f32.gmra.mxu0 %v363
    %v1741 = vpop.f32.mrf.mxu0
    %v1742 = vadd.f32 0.0, %v1741
    %1743 = vmatmul.f32.gmra.mxu0 %v366
    %v1744 = vpop.f32.mrf.mxu0
    %v1745 = vadd.f32 0.0, %v1744
    %1746 = vmatmul.f32.gmra.mxu0 %v369
    %v1747 = vpop.f32.mrf.mxu0
    %v1748 = vadd.f32 0.0, %v1747
    %1749 = vmatmul.f32.gmra.mxu0 %v372
    %v1750 = vpop.f32.mrf.mxu0
    %v1751 = vadd.f32 0.0, %v1750
    %1752 = vmatmul.f32.gmra.mxu0 %v375
    %v1753 = vpop.f32.mrf.mxu0
    %v1754 = vadd.f32 0.0, %v1753
    %1755 = vmatmul.f32.gmra.mxu0 %v378
    %v1756 = vpop.f32.mrf.mxu0
    %v1757 = vadd.f32 0.0, %v1756
    %1758 = vmatmul.f32.gmra.mxu0 %v381
    %v1759 = vpop.f32.mrf.mxu0
    %v1760 = vadd.f32 0.0, %v1759
    %1761 = vmatmul.f32.gmra.mxu0 %v384
    %v1762 = vpop.f32.mrf.mxu0
    %v1763 = vadd.f32 0.0, %v1762
    %1764 = vmatmul.f32.gmra.mxu0 %v387
    %v1765 = vpop.f32.mrf.mxu0
    %v1766 = vadd.f32 0.0, %v1765
    %1767 = vmatmul.f32.gmra.mxu0 %v390
    %v1768 = vpop.f32.mrf.mxu0
    %v1769 = vadd.f32 0.0, %v1768
    %1770 = vmatmul.f32.gmra.mxu0 %v393
    %v1771 = vpop.f32.mrf.mxu0
    %v1772 = vadd.f32 0.0, %v1771
    %1773 = vmatmul.f32.gmra.mxu0 %v396
    %v1774 = vpop.f32.mrf.mxu0
    %v1775 = vadd.f32 0.0, %v1774
    %1776 = vmatmul.f32.gmra.mxu0 %v399
    %v1777 = vpop.f32.mrf.mxu0
    %v1778 = vadd.f32 0.0, %v1777
    %1779 = vmatmul.f32.gmra.mxu0 %v402
    %v1780 = vpop.f32.mrf.mxu0
    %v1781 = vadd.f32 0.0, %v1780
    %1782 = vmatmul.f32.gmra.mxu0 %v405
    %v1783 = vpop.f32.mrf.mxu0
    %v1784 = vadd.f32 0.0, %v1783
    %1785 = vmatmul.f32.gmra.mxu0 %v408
    %v1786 = vpop.f32.mrf.mxu0
    %v1787 = vadd.f32 0.0, %v1786
    %1788 = vmatmul.f32.gmra.mxu0 %v411
    %v1789 = vpop.f32.mrf.mxu0
    %v1790 = vadd.f32 0.0, %v1789
    %1791 = vmatmul.f32.gmra.mxu0 %v414
    %v1792 = vpop.f32.mrf.mxu0
    %v1793 = vadd.f32 0.0, %v1792
    %1794 = vmatmul.f32.gmra.mxu0 %v417
    %v1795 = vpop.f32.mrf.mxu0
    %v1796 = vadd.f32 0.0, %v1795
    %1797 = vmatmul.f32.gmra.mxu0 %v420
    %v1798 = vpop.f32.mrf.mxu0
    %v1799 = vadd.f32 0.0, %v1798
    %1800 = vmatmul.f32.gmra.mxu0 %v423
    %v1801 = vpop.f32.mrf.mxu0
    %v1802 = vadd.f32 0.0, %v1801
    %1803 = vmatmul.f32.gmra.mxu0 %v426
    %v1804 = vpop.f32.mrf.mxu0
    %v1805 = vadd.f32 0.0, %v1804
    %1806 = vmatmul.f32.gmra.mxu0 %v429
    %v1807 = vpop.f32.mrf.mxu0
    %v1808 = vadd.f32 0.0, %v1807
    %1809 = vmatmul.f32.gmra.mxu0 %v432
    %v1810 = vpop.f32.mrf.mxu0
    %v1811 = vadd.f32 0.0, %v1810
    %1812 = vmatmul.f32.gmra.mxu0 %v435
    %v1813 = vpop.f32.mrf.mxu0
    %v1814 = vadd.f32 0.0, %v1813
    %1815 = vmatmul.f32.gmra.mxu0 %v438
    %v1816 = vpop.f32.mrf.mxu0
    %v1817 = vadd.f32 0.0, %v1816
    %1818 = vmatmul.f32.gmra.mxu0 %v441
    %v1819 = vpop.f32.mrf.mxu0
    %v1820 = vadd.f32 0.0, %v1819
    %1821 = vmatmul.f32.gmra.mxu0 %v444
    %v1822 = vpop.f32.mrf.mxu0
    %v1823 = vadd.f32 0.0, %v1822
    %1824 = vmatmul.f32.gmra.mxu0 %v447
    %v1825 = vpop.f32.mrf.mxu0
    %v1826 = vadd.f32 0.0, %v1825
    %1827 = vmatmul.f32.gmra.mxu0 %v450
    %v1828 = vpop.f32.mrf.mxu0
    %v1829 = vadd.f32 0.0, %v1828
    %1830 = vmatmul.f32.gmra.mxu0 %v453
    %v1831 = vpop.f32.mrf.mxu0
    %v1832 = vadd.f32 0.0, %v1831
    %1833 = vmatmul.f32.gmra.mxu0 %v456
    %v1834 = vpop.f32.mrf.mxu0
    %v1835 = vadd.f32 0.0, %v1834
    %1836 = vmatmul.f32.gmra.mxu0 %v459
    %v1837 = vpop.f32.mrf.mxu0
    %v1838 = vadd.f32 0.0, %v1837
    %1839 = vmatmul.f32.gmra.mxu0 %v462
    %v1840 = vpop.f32.mrf.mxu0
    %v1841 = vadd.f32 0.0, %v1840
    %1842 = vmatmul.f32.gmra.mxu0 %v465
    %v1843 = vpop.f32.mrf.mxu0
    %v1844 = vadd.f32 0.0, %v1843
    %1845 = vmatmul.f32.gmra.mxu0 %v468
    %v1846 = vpop.f32.mrf.mxu0
    %v1847 = vadd.f32 0.0, %v1846
    %1848 = vmatmul.f32.gmra.mxu0 %v471
    %v1849 = vpop.f32.mrf.mxu0
    %v1850 = vadd.f32 0.0, %v1849
    %1851 = vmatmul.f32.gmra.mxu0 %v474
    %v1852 = vpop.f32.mrf.mxu0
    %v1853 = vadd.f32 0.0, %v1852
    %1854 = vmatmul.f32.gmra.mxu0 %v477
    %v1855 = vpop.f32.mrf.mxu0
    %v1856 = vadd.f32 0.0, %v1855
    %1857 = vmatmul.f32.gmra.mxu0 %v480
    %v1858 = vpop.f32.mrf.mxu0
    %v1859 = vadd.f32 0.0, %v1858
    %1860 = vmatmul.f32.gmra.mxu0 %v483
    %v1861 = vpop.f32.mrf.mxu0
    %v1862 = vadd.f32 0.0, %v1861
    %1863 = vmatmul.f32.gmra.mxu0 %v486
    %v1864 = vpop.f32.mrf.mxu0
    %v1865 = vadd.f32 0.0, %v1864
    %1866 = vmatmul.f32.gmra.mxu0 %v489
    %v1867 = vpop.f32.mrf.mxu0
    %v1868 = vadd.f32 0.0, %v1867
    %1869 = vmatmul.f32.gmra.mxu0 %v492
    %v1870 = vpop.f32.mrf.mxu0
    %v1871 = vadd.f32 0.0, %v1870
    %1872 = vmatmul.f32.gmra.mxu0 %v495
    %v1873 = vpop.f32.mrf.mxu0
    %v1874 = vadd.f32 0.0, %v1873
    %1875 = vdwg.mxu0
    %1876 = vst [vmem:[%s3] sm:$0xff] %v515
    %1877 = vst [vmem:[%s3 + $0x8] sm:$0xff] %v712
    %1878 = vst [vmem:[%s3 + $0x10] sm:$0xff] %v909
    %1879 = vst [vmem:[%s3 + $0x18] sm:$0xff] %v1106
    %1880 = vst [vmem:[%s3 + $0x20] sm:$0xff] %v1303
    %1881 = vst [vmem:[%s3 + $0x28] sm:$0xff] %v1500
    %vm1882 = vcmask 130048
    %1883 = vst.msk [vmem:[%s3 + $0x30] sm:$0xff] %vm1882, %v1697
    %1884 = vst [vmem:[%s3 + $0x38] sm:$0xff] %v518
    %1885 = vst [vmem:[%s3 + $0x40] sm:$0xff] %v715
    %1886 = vst [vmem:[%s3 + $0x48] sm:$0xff] %v912
    %1887 = vst [vmem:[%s3 + $0x50] sm:$0xff] %v1109
    %1888 = vst [vmem:[%s3 + $0x58] sm:$0xff] %v1306
    %1889 = vst [vmem:[%s3 + $0x60] sm:$0xff] %v1503
    %1890 = vst.msk [vmem:[%s3 + $0x68] sm:$0xff] %vm1882, %v1700
    %1891 = vst [vmem:[%s3 + $0x70] sm:$0xff] %v521
    %1892 = vst [vmem:[%s3 + $0x78] sm:$0xff] %v718
    %1893 = vst [vmem:[%s3 + $0x80] sm:$0xff] %v915
    %1894 = vst [vmem:[%s3 + $0x88] sm:$0xff] %v1112
    %1895 = vst [vmem:[%s3 + $0x90] sm:$0xff] %v1309
    %1896 = vst [vmem:[%s3 + $0x98] sm:$0xff] %v1506
    %1897 = vst.msk [vmem:[%s3 + $0xa0] sm:$0xff] %vm1882, %v1703
    %1898 = vst [vmem:[%s3 + $0xa8] sm:$0xff] %v524
    %1899 = vst [vmem:[%s3 + $0xb0] sm:$0xff] %v721
    %1900 = vst [vmem:[%s3 + $0xb8] sm:$0xff] %v918
    %1901 = vst [vmem:[%s3 + $0xc0] sm:$0xff] %v1115
    %1902 = vst [vmem:[%s3 + $0xc8] sm:$0xff] %v1312
    %1903 = vst [vmem:[%s3 + $0xd0] sm:$0xff] %v1509
    %1904 = vst.msk [vmem:[%s3 + $0xd8] sm:$0xff] %vm1882, %v1706
    %1905 = vst [vmem:[%s3 + $0xe0] sm:$0xff] %v527
    %1906 = vst [vmem:[%s3 + $0xe8] sm:$0xff] %v724
    %1907 = vst [vmem:[%s3 + $0xf0] sm:$0xff] %v921
    %1908 = vst [vmem:[%s3 + $0xf8] sm:$0xff] %v1118
    %1909 = vst [vmem:[%s3 + $0x100] sm:$0xff] %v1315
    %1910 = vst [vmem:[%s3 + $0x108] sm:$0xff] %v1512
    %1911 = vst.msk [vmem:[%s3 + $0x110] sm:$0xff] %vm1882, %v1709
    %1912 = vst [vmem:[%s3 + $0x118] sm:$0xff] %v530
    %1913 = vst [vmem:[%s3 + $0x120] sm:$0xff] %v727
    %1914 = vst [vmem:[%s3 + $0x128] sm:$0xff] %v924
    %1915 = vst [vmem:[%s3 + $0x130] sm:$0xff] %v1121
    %1916 = vst [vmem:[%s3 + $0x138] sm:$0xff] %v1318
    %1917 = vst [vmem:[%s3 + $0x140] sm:$0xff] %v1515
    %1918 = vst.msk [vmem:[%s3 + $0x148] sm:$0xff] %vm1882, %v1712
    %1919 = vst [vmem:[%s3 + $0x150] sm:$0xff] %v533
    %1920 = vst [vmem:[%s3 + $0x158] sm:$0xff] %v730
    %1921 = vst [vmem:[%s3 + $0x160] sm:$0xff] %v927
    %1922 = vst [vmem:[%s3 + $0x168] sm:$0xff] %v1124
    %1923 = vst [vmem:[%s3 + $0x170] sm:$0xff] %v1321
    %1924 = vst [vmem:[%s3 + $0x178] sm:$0xff] %v1518
    %1925 = vst.msk [vmem:[%s3 + $0x180] sm:$0xff] %vm1882, %v1715
    %1926 = vst [vmem:[%s3 + $0x188] sm:$0xff] %v536
    %1927 = vst [vmem:[%s3 + $0x190] sm:$0xff] %v733
    %1928 = vst [vmem:[%s3 + $0x198] sm:$0xff] %v930
    %1929 = vst [vmem:[%s3 + $0x1a0] sm:$0xff] %v1127
    %1930 = vst [vmem:[%s3 + $0x1a8] sm:$0xff] %v1324
    %1931 = vst [vmem:[%s3 + $0x1b0] sm:$0xff] %v1521
    %1932 = vst.msk [vmem:[%s3 + $0x1b8] sm:$0xff] %vm1882, %v1718
    %1933 = vst [vmem:[%s3 + $0x1c0] sm:$0xff] %v539
    %1934 = vst [vmem:[%s3 + $0x1c8] sm:$0xff] %v736
    %1935 = vst [vmem:[%s3 + $0x1d0] sm:$0xff] %v933
    %1936 = vst [vmem:[%s3 + $0x1d8] sm:$0xff] %v1130
    %1937 = vst [vmem:[%s3 + $0x1e0] sm:$0xff] %v1327
    %1938 = vst [vmem:[%s3 + $0x1e8] sm:$0xff] %v1524
    %1939 = vst.msk [vmem:[%s3 + $0x1f0] sm:$0xff] %vm1882, %v1721
    %1940 = vst [vmem:[%s3 + $0x1f8] sm:$0xff] %v542
    %1941 = vst [vmem:[%s3 + $0x200] sm:$0xff] %v739
    %1942 = vst [vmem:[%s3 + $0x208] sm:$0xff] %v936
    %1943 = vst [vmem:[%s3 + $0x210] sm:$0xff] %v1133
    %1944 = vst [vmem:[%s3 + $0x218] sm:$0xff] %v1330
    %1945 = vst [vmem:[%s3 + $0x220] sm:$0xff] %v1527
    %1946 = vst.msk [vmem:[%s3 + $0x228] sm:$0xff] %vm1882, %v1724
    %1947 = vst [vmem:[%s3 + $0x230] sm:$0xff] %v545
    %1948 = vst [vmem:[%s3 + $0x238] sm:$0xff] %v742
    %1949 = vst [vmem:[%s3 + $0x240] sm:$0xff] %v939
    %1950 = vst [vmem:[%s3 + $0x248] sm:$0xff] %v1136
    %1951 = vst [vmem:[%s3 + $0x250] sm:$0xff] %v1333
    %1952 = vst [vmem:[%s3 + $0x258] sm:$0xff] %v1530
    %1953 = vst.msk [vmem:[%s3 + $0x260] sm:$0xff] %vm1882, %v1727
    %1954 = vst [vmem:[%s3 + $0x268] sm:$0xff] %v548
    %1955 = vst [vmem:[%s3 + $0x270] sm:$0xff] %v745
    %1956 = vst [vmem:[%s3 + $0x278] sm:$0xff] %v942
    %1957 = vst [vmem:[%s3 + $0x280] sm:$0xff] %v1139
    %1958 = vst [vmem:[%s3 + $0x288] sm:$0xff] %v1336
    %1959 = vst [vmem:[%s3 + $0x290] sm:$0xff] %v1533
    %1960 = vst.msk [vmem:[%s3 + $0x298] sm:$0xff] %vm1882, %v1730
    %1961 = vst [vmem:[%s3 + $0x2a0] sm:$0xff] %v551
    %1962 = vst [vmem:[%s3 + $0x2a8] sm:$0xff] %v748
    %1963 = vst [vmem:[%s3 + $0x2b0] sm:$0xff] %v945
    %1964 = vst [vmem:[%s3 + $0x2b8] sm:$0xff] %v1142
    %1965 = vst [vmem:[%s3 + $0x2c0] sm:$0xff] %v1339
    %1966 = vst [vmem:[%s3 + $0x2c8] sm:$0xff] %v1536
    %1967 = vst.msk [vmem:[%s3 + $0x2d0] sm:$0xff] %vm1882, %v1733
    %1968 = vst [vmem:[%s3 + $0x2d8] sm:$0xff] %v554
    %1969 = vst [vmem:[%s3 + $0x2e0] sm:$0xff] %v751
    %1970 = vst [vmem:[%s3 + $0x2e8] sm:$0xff] %v948
    %1971 = vst [vmem:[%s3 + $0x2f0] sm:$0xff] %v1145
    %1972 = vst [vmem:[%s3 + $0x2f8] sm:$0xff] %v1342
    %1973 = vst [vmem:[%s3 + $0x300] sm:$0xff] %v1539
    %1974 = vst.msk [vmem:[%s3 + $0x308] sm:$0xff] %vm1882, %v1736
    %1975 = vst [vmem:[%s3 + $0x310] sm:$0xff] %v557
    %1976 = vst [vmem:[%s3 + $0x318] sm:$0xff] %v754
    %1977 = vst [vmem:[%s3 + $0x320] sm:$0xff] %v951
    %1978 = vst [vmem:[%s3 + $0x328] sm:$0xff] %v1148
    %1979 = vst [vmem:[%s3 + $0x330] sm:$0xff] %v1345
    %1980 = vst [vmem:[%s3 + $0x338] sm:$0xff] %v1542
    %1981 = vst.msk [vmem:[%s3 + $0x340] sm:$0xff] %vm1882, %v1739
    %1982 = vst [vmem:[%s3 + $0x348] sm:$0xff] %v560
    %1983 = vst [vmem:[%s3 + $0x350] sm:$0xff] %v757
    %1984 = vst [vmem:[%s3 + $0x358] sm:$0xff] %v954
    %1985 = vst [vmem:[%s3 + $0x360] sm:$0xff] %v1151
    %1986 = vst [vmem:[%s3 + $0x368] sm:$0xff] %v1348
    %1987 = vst [vmem:[%s3 + $0x370] sm:$0xff] %v1545
    %1988 = vst.msk [vmem:[%s3 + $0x378] sm:$0xff] %vm1882, %v1742
    %1989 = vst [vmem:[%s3 + $0x380] sm:$0xff] %v563
    %1990 = vst [vmem:[%s3 + $0x388] sm:$0xff] %v760
    %1991 = vst [vmem:[%s3 + $0x390] sm:$0xff] %v957
    %1992 = vst [vmem:[%s3 + $0x398] sm:$0xff] %v1154
    %1993 = vst [vmem:[%s3 + $0x3a0] sm:$0xff] %v1351
    %1994 = vst [vmem:[%s3 + $0x3a8] sm:$0xff] %v1548
    %1995 = vst.msk [vmem:[%s3 + $0x3b0] sm:$0xff] %vm1882, %v1745
    %1996 = vst [vmem:[%s3 + $0x3b8] sm:$0xff] %v566
    %1997 = vst [vmem:[%s3 + $0x3c0] sm:$0xff] %v763
    %1998 = vst [vmem:[%s3 + $0x3c8] sm:$0xff] %v960
    %1999 = vst [vmem:[%s3 + $0x3d0] sm:$0xff] %v1157
    %2000 = vst [vmem:[%s3 + $0x3d8] sm:$0xff] %v1354
    %2001 = vst [vmem:[%s3 + $0x3e0] sm:$0xff] %v1551
    %2002 = vst.msk [vmem:[%s3 + $0x3e8] sm:$0xff] %vm1882, %v1748
    %2003 = vst [vmem:[%s3 + $0x3f0] sm:$0xff] %v569
    %2004 = vst [vmem:[%s3 + $0x3f8] sm:$0xff] %v766
    %2005 = vst [vmem:[%s3 + $0x400] sm:$0xff] %v963
    %2006 = vst [vmem:[%s3 + $0x408] sm:$0xff] %v1160
    %2007 = vst [vmem:[%s3 + $0x410] sm:$0xff] %v1357
    %2008 = vst [vmem:[%s3 + $0x418] sm:$0xff] %v1554
    %2009 = vst.msk [vmem:[%s3 + $0x420] sm:$0xff] %vm1882, %v1751
    %2010 = vst [vmem:[%s3 + $0x428] sm:$0xff] %v572
    %2011 = vst [vmem:[%s3 + $0x430] sm:$0xff] %v769
    %2012 = vst [vmem:[%s3 + $0x438] sm:$0xff] %v966
    %2013 = vst [vmem:[%s3 + $0x440] sm:$0xff] %v1163
    %2014 = vst [vmem:[%s3 + $0x448] sm:$0xff] %v1360
    %2015 = vst [vmem:[%s3 + $0x450] sm:$0xff] %v1557
    %2016 = vst.msk [vmem:[%s3 + $0x458] sm:$0xff] %vm1882, %v1754
    %2017 = vst [vmem:[%s3 + $0x460] sm:$0xff] %v575
    %2018 = vst [vmem:[%s3 + $0x468] sm:$0xff] %v772
    %2019 = vst [vmem:[%s3 + $0x470] sm:$0xff] %v969
    %2020 = vst [vmem:[%s3 + $0x478] sm:$0xff] %v1166
    %2021 = vst [vmem:[%s3 + $0x480] sm:$0xff] %v1363
    %2022 = vst [vmem:[%s3 + $0x488] sm:$0xff] %v1560
    %2023 = vst.msk [vmem:[%s3 + $0x490] sm:$0xff] %vm1882, %v1757
    %2024 = vst [vmem:[%s3 + $0x498] sm:$0xff] %v578
    %2025 = vst [vmem:[%s3 + $0x4a0] sm:$0xff] %v775
    %2026 = vst [vmem:[%s3 + $0x4a8] sm:$0xff] %v972
    %2027 = vst [vmem:[%s3 + $0x4b0] sm:$0xff] %v1169
    %2028 = vst [vmem:[%s3 + $0x4b8] sm:$0xff] %v1366
    %2029 = vst [vmem:[%s3 + $0x4c0] sm:$0xff] %v1563
    %2030 = vst.msk [vmem:[%s3 + $0x4c8] sm:$0xff] %vm1882, %v1760
    %2031 = vst [vmem:[%s3 + $0x4d0] sm:$0xff] %v581
    %2032 = vst [vmem:[%s3 + $0x4d8] sm:$0xff] %v778
    %2033 = vst [vmem:[%s3 + $0x4e0] sm:$0xff] %v975
    %2034 = vst [vmem:[%s3 + $0x4e8] sm:$0xff] %v1172
    %2035 = vst [vmem:[%s3 + $0x4f0] sm:$0xff] %v1369
    %2036 = vst [vmem:[%s3 + $0x4f8] sm:$0xff] %v1566
    %2037 = vst.msk [vmem:[%s3 + $0x500] sm:$0xff] %vm1882, %v1763
    %2038 = vst [vmem:[%s3 + $0x508] sm:$0xff] %v584
    %2039 = vst [vmem:[%s3 + $0x510] sm:$0xff] %v781
    %2040 = vst [vmem:[%s3 + $0x518] sm:$0xff] %v978
    %2041 = vst [vmem:[%s3 + $0x520] sm:$0xff] %v1175
    %2042 = vst [vmem:[%s3 + $0x528] sm:$0xff] %v1372
    %2043 = vst [vmem:[%s3 + $0x530] sm:$0xff] %v1569
    %2044 = vst.msk [vmem:[%s3 + $0x538] sm:$0xff] %vm1882, %v1766
    %2045 = vst [vmem:[%s3 + $0x540] sm:$0xff] %v587
    %2046 = vst [vmem:[%s3 + $0x548] sm:$0xff] %v784
    %2047 = vst [vmem:[%s3 + $0x550] sm:$0xff] %v981
    %2048 = vst [vmem:[%s3 + $0x558] sm:$0xff] %v1178
    %2049 = vst [vmem:[%s3 + $0x560] sm:$0xff] %v1375
    %2050 = vst [vmem:[%s3 + $0x568] sm:$0xff] %v1572
    %2051 = vst.msk [vmem:[%s3 + $0x570] sm:$0xff] %vm1882, %v1769
    %2052 = vst [vmem:[%s3 + $0x578] sm:$0xff] %v590
    %2053 = vst [vmem:[%s3 + $0x580] sm:$0xff] %v787
    %2054 = vst [vmem:[%s3 + $0x588] sm:$0xff] %v984
    %2055 = vst [vmem:[%s3 + $0x590] sm:$0xff] %v1181
    %2056 = vst [vmem:[%s3 + $0x598] sm:$0xff] %v1378
    %2057 = vst [vmem:[%s3 + $0x5a0] sm:$0xff] %v1575
    %2058 = vst.msk [vmem:[%s3 + $0x5a8] sm:$0xff] %vm1882, %v1772
    %2059 = vst [vmem:[%s3 + $0x5b0] sm:$0xff] %v593
    %2060 = vst [vmem:[%s3 + $0x5b8] sm:$0xff] %v790
    %2061 = vst [vmem:[%s3 + $0x5c0] sm:$0xff] %v987
    %2062 = vst [vmem:[%s3 + $0x5c8] sm:$0xff] %v1184
    %2063 = vst [vmem:[%s3 + $0x5d0] sm:$0xff] %v1381
    %2064 = vst [vmem:[%s3 + $0x5d8] sm:$0xff] %v1578
    %2065 = vst.msk [vmem:[%s3 + $0x5e0] sm:$0xff] %vm1882, %v1775
    %2066 = vst [vmem:[%s3 + $0x5e8] sm:$0xff] %v596
    %2067 = vst [vmem:[%s3 + $0x5f0] sm:$0xff] %v793
    %2068 = vst [vmem:[%s3 + $0x5f8] sm:$0xff] %v990
    %2069 = vst [vmem:[%s3 + $0x600] sm:$0xff] %v1187
    %2070 = vst [vmem:[%s3 + $0x608] sm:$0xff] %v1384
    %2071 = vst [vmem:[%s3 + $0x610] sm:$0xff] %v1581
    %2072 = vst.msk [vmem:[%s3 + $0x618] sm:$0xff] %vm1882, %v1778
    %2073 = vst [vmem:[%s3 + $0x620] sm:$0xff] %v599
    %2074 = vst [vmem:[%s3 + $0x628] sm:$0xff] %v796
    %2075 = vst [vmem:[%s3 + $0x630] sm:$0xff] %v993
    %2076 = vst [vmem:[%s3 + $0x638] sm:$0xff] %v1190
    %2077 = vst [vmem:[%s3 + $0x640] sm:$0xff] %v1387
    %2078 = vst [vmem:[%s3 + $0x648] sm:$0xff] %v1584
    %2079 = vst.msk [vmem:[%s3 + $0x650] sm:$0xff] %vm1882, %v1781
    %2080 = vst [vmem:[%s3 + $0x658] sm:$0xff] %v602
    %2081 = vst [vmem:[%s3 + $0x660] sm:$0xff] %v799
    %2082 = vst [vmem:[%s3 + $0x668] sm:$0xff] %v996
    %2083 = vst [vmem:[%s3 + $0x670] sm:$0xff] %v1193
    %2084 = vst [vmem:[%s3 + $0x678] sm:$0xff] %v1390
    %2085 = vst [vmem:[%s3 + $0x680] sm:$0xff] %v1587
    %2086 = vst.msk [vmem:[%s3 + $0x688] sm:$0xff] %vm1882, %v1784
    %2087 = vst [vmem:[%s3 + $0x690] sm:$0xff] %v605
    %2088 = vst [vmem:[%s3 + $0x698] sm:$0xff] %v802
    %2089 = vst [vmem:[%s3 + $0x6a0] sm:$0xff] %v999
    %2090 = vst [vmem:[%s3 + $0x6a8] sm:$0xff] %v1196
    %2091 = vst [vmem:[%s3 + $0x6b0] sm:$0xff] %v1393
    %2092 = vst [vmem:[%s3 + $0x6b8] sm:$0xff] %v1590
    %2093 = vst.msk [vmem:[%s3 + $0x6c0] sm:$0xff] %vm1882, %v1787
    %2094 = vst [vmem:[%s3 + $0x6c8] sm:$0xff] %v608
    %2095 = vst [vmem:[%s3 + $0x6d0] sm:$0xff] %v805
    %2096 = vst [vmem:[%s3 + $0x6d8] sm:$0xff] %v1002
    %2097 = vst [vmem:[%s3 + $0x6e0] sm:$0xff] %v1199
    %2098 = vst [vmem:[%s3 + $0x6e8] sm:$0xff] %v1396
    %2099 = vst [vmem:[%s3 + $0x6f0] sm:$0xff] %v1593
    %2100 = vst.msk [vmem:[%s3 + $0x6f8] sm:$0xff] %vm1882, %v1790
    %2101 = vst [vmem:[%s3 + $0x700] sm:$0xff] %v611
    %2102 = vst [vmem:[%s3 + $0x708] sm:$0xff] %v808
    %2103 = vst [vmem:[%s3 + $0x710] sm:$0xff] %v1005
    %2104 = vst [vmem:[%s3 + $0x718] sm:$0xff] %v1202
    %2105 = vst [vmem:[%s3 + $0x720] sm:$0xff] %v1399
    %2106 = vst [vmem:[%s3 + $0x728] sm:$0xff] %v1596
    %2107 = vst.msk [vmem:[%s3 + $0x730] sm:$0xff] %vm1882, %v1793
    %2108 = vst [vmem:[%s3 + $0x738] sm:$0xff] %v614
    %2109 = vst [vmem:[%s3 + $0x740] sm:$0xff] %v811
    %2110 = vst [vmem:[%s3 + $0x748] sm:$0xff] %v1008
    %2111 = vst [vmem:[%s3 + $0x750] sm:$0xff] %v1205
    %2112 = vst [vmem:[%s3 + $0x758] sm:$0xff] %v1402
    %2113 = vst [vmem:[%s3 + $0x760] sm:$0xff] %v1599
    %2114 = vst.msk [vmem:[%s3 + $0x768] sm:$0xff] %vm1882, %v1796
    %2115 = vst [vmem:[%s3 + $0x770] sm:$0xff] %v617
    %2116 = vst [vmem:[%s3 + $0x778] sm:$0xff] %v814
    %2117 = vst [vmem:[%s3 + $0x780] sm:$0xff] %v1011
    %2118 = vst [vmem:[%s3 + $0x788] sm:$0xff] %v1208
    %2119 = vst [vmem:[%s3 + $0x790] sm:$0xff] %v1405
    %2120 = vst [vmem:[%s3 + $0x798] sm:$0xff] %v1602
    %2121 = vst.msk [vmem:[%s3 + $0x7a0] sm:$0xff] %vm1882, %v1799
    %2122 = vst [vmem:[%s3 + $0x7a8] sm:$0xff] %v620
    %2123 = vst [vmem:[%s3 + $0x7b0] sm:$0xff] %v817
    %2124 = vst [vmem:[%s3 + $0x7b8] sm:$0xff] %v1014
    %2125 = vst [vmem:[%s3 + $0x7c0] sm:$0xff] %v1211
    %2126 = vst [vmem:[%s3 + $0x7c8] sm:$0xff] %v1408
    %2127 = vst [vmem:[%s3 + $0x7d0] sm:$0xff] %v1605
    %2128 = vst.msk [vmem:[%s3 + $0x7d8] sm:$0xff] %vm1882, %v1802
    %2129 = vst [vmem:[%s3 + $0x7e0] sm:$0xff] %v623
    %2130 = vst [vmem:[%s3 + $0x7e8] sm:$0xff] %v820
    %2131 = vst [vmem:[%s3 + $0x7f0] sm:$0xff] %v1017
    %2132 = vst [vmem:[%s3 + $0x7f8] sm:$0xff] %v1214
    %2133 = vst [vmem:[%s3 + $0x800] sm:$0xff] %v1411
    %2134 = vst [vmem:[%s3 + $0x808] sm:$0xff] %v1608
    %2135 = vst.msk [vmem:[%s3 + $0x810] sm:$0xff] %vm1882, %v1805
    %2136 = vst [vmem:[%s3 + $0x818] sm:$0xff] %v626
    %2137 = vst [vmem:[%s3 + $0x820] sm:$0xff] %v823
    %2138 = vst [vmem:[%s3 + $0x828] sm:$0xff] %v1020
    %2139 = vst [vmem:[%s3 + $0x830] sm:$0xff] %v1217
    %2140 = vst [vmem:[%s3 + $0x838] sm:$0xff] %v1414
    %2141 = vst [vmem:[%s3 + $0x840] sm:$0xff] %v1611
    %2142 = vst.msk [vmem:[%s3 + $0x848] sm:$0xff] %vm1882, %v1808
    %2143 = vst [vmem:[%s3 + $0x850] sm:$0xff] %v629
    %2144 = vst [vmem:[%s3 + $0x858] sm:$0xff] %v826
    %2145 = vst [vmem:[%s3 + $0x860] sm:$0xff] %v1023
    %2146 = vst [vmem:[%s3 + $0x868] sm:$0xff] %v1220
    %2147 = vst [vmem:[%s3 + $0x870] sm:$0xff] %v1417
    %2148 = vst [vmem:[%s3 + $0x878] sm:$0xff] %v1614
    %2149 = vst.msk [vmem:[%s3 + $0x880] sm:$0xff] %vm1882, %v1811
    %2150 = vst [vmem:[%s3 + $0x888] sm:$0xff] %v632
    %2151 = vst [vmem:[%s3 + $0x890] sm:$0xff] %v829
    %2152 = vst [vmem:[%s3 + $0x898] sm:$0xff] %v1026
    %2153 = vst [vmem:[%s3 + $0x8a0] sm:$0xff] %v1223
    %2154 = vst [vmem:[%s3 + $0x8a8] sm:$0xff] %v1420
    %2155 = vst [vmem:[%s3 + $0x8b0] sm:$0xff] %v1617
    %2156 = vst.msk [vmem:[%s3 + $0x8b8] sm:$0xff] %vm1882, %v1814
    %2157 = vst [vmem:[%s3 + $0x8c0] sm:$0xff] %v635
    %2158 = vst [vmem:[%s3 + $0x8c8] sm:$0xff] %v832
    %2159 = vst [vmem:[%s3 + $0x8d0] sm:$0xff] %v1029
    %2160 = vst [vmem:[%s3 + $0x8d8] sm:$0xff] %v1226
    %2161 = vst [vmem:[%s3 + $0x8e0] sm:$0xff] %v1423
    %2162 = vst [vmem:[%s3 + $0x8e8] sm:$0xff] %v1620
    %2163 = vst.msk [vmem:[%s3 + $0x8f0] sm:$0xff] %vm1882, %v1817
    %2164 = vst [vmem:[%s3 + $0x8f8] sm:$0xff] %v638
    %2165 = vst [vmem:[%s3 + $0x900] sm:$0xff] %v835
    %2166 = vst [vmem:[%s3 + $0x908] sm:$0xff] %v1032
    %2167 = vst [vmem:[%s3 + $0x910] sm:$0xff] %v1229
    %2168 = vst [vmem:[%s3 + $0x918] sm:$0xff] %v1426
    %2169 = vst [vmem:[%s3 + $0x920] sm:$0xff] %v1623
    %2170 = vst.msk [vmem:[%s3 + $0x928] sm:$0xff] %vm1882, %v1820
    %2171 = vst [vmem:[%s3 + $0x930] sm:$0xff] %v641
    %2172 = vst [vmem:[%s3 + $0x938] sm:$0xff] %v838
    %2173 = vst [vmem:[%s3 + $0x940] sm:$0xff] %v1035
    %2174 = vst [vmem:[%s3 + $0x948] sm:$0xff] %v1232
    %2175 = vst [vmem:[%s3 + $0x950] sm:$0xff] %v1429
    %2176 = vst [vmem:[%s3 + $0x958] sm:$0xff] %v1626
    %2177 = vst.msk [vmem:[%s3 + $0x960] sm:$0xff] %vm1882, %v1823
    %2178 = vst [vmem:[%s3 + $0x968] sm:$0xff] %v644
    %2179 = vst [vmem:[%s3 + $0x970] sm:$0xff] %v841
    %2180 = vst [vmem:[%s3 + $0x978] sm:$0xff] %v1038
    %2181 = vst [vmem:[%s3 + $0x980] sm:$0xff] %v1235
    %2182 = vst [vmem:[%s3 + $0x988] sm:$0xff] %v1432
    %2183 = vst [vmem:[%s3 + $0x990] sm:$0xff] %v1629
    %2184 = vst.msk [vmem:[%s3 + $0x998] sm:$0xff] %vm1882, %v1826
    %2185 = vst [vmem:[%s3 + $0x9a0] sm:$0xff] %v647
    %2186 = vst [vmem:[%s3 + $0x9a8] sm:$0xff] %v844
    %2187 = vst [vmem:[%s3 + $0x9b0] sm:$0xff] %v1041
    %2188 = vst [vmem:[%s3 + $0x9b8] sm:$0xff] %v1238
    %2189 = vst [vmem:[%s3 + $0x9c0] sm:$0xff] %v1435
    %2190 = vst [vmem:[%s3 + $0x9c8] sm:$0xff] %v1632
    %2191 = vst.msk [vmem:[%s3 + $0x9d0] sm:$0xff] %vm1882, %v1829
    %2192 = vst [vmem:[%s3 + $0x9d8] sm:$0xff] %v650
    %2193 = vst [vmem:[%s3 + $0x9e0] sm:$0xff] %v847
    %2194 = vst [vmem:[%s3 + $0x9e8] sm:$0xff] %v1044
    %2195 = vst [vmem:[%s3 + $0x9f0] sm:$0xff] %v1241
    %2196 = vst [vmem:[%s3 + $0x9f8] sm:$0xff] %v1438
    %2197 = vst [vmem:[%s3 + $0xa00] sm:$0xff] %v1635
    %2198 = vst.msk [vmem:[%s3 + $0xa08] sm:$0xff] %vm1882, %v1832
    %2199 = vst [vmem:[%s3 + $0xa10] sm:$0xff] %v653
    %2200 = vst [vmem:[%s3 + $0xa18] sm:$0xff] %v850
    %2201 = vst [vmem:[%s3 + $0xa20] sm:$0xff] %v1047
    %2202 = vst [vmem:[%s3 + $0xa28] sm:$0xff] %v1244
    %2203 = vst [vmem:[%s3 + $0xa30] sm:$0xff] %v1441
    %2204 = vst [vmem:[%s3 + $0xa38] sm:$0xff] %v1638
    %2205 = vst.msk [vmem:[%s3 + $0xa40] sm:$0xff] %vm1882, %v1835
    %2206 = vst [vmem:[%s3 + $0xa48] sm:$0xff] %v656
    %2207 = vst [vmem:[%s3 + $0xa50] sm:$0xff] %v853
    %2208 = vst [vmem:[%s3 + $0xa58] sm:$0xff] %v1050
    %2209 = vst [vmem:[%s3 + $0xa60] sm:$0xff] %v1247
    %2210 = vst [vmem:[%s3 + $0xa68] sm:$0xff] %v1444
    %2211 = vst [vmem:[%s3 + $0xa70] sm:$0xff] %v1641
    %2212 = vst.msk [vmem:[%s3 + $0xa78] sm:$0xff] %vm1882, %v1838
    %2213 = vst [vmem:[%s3 + $0xa80] sm:$0xff] %v659
    %2214 = vst [vmem:[%s3 + $0xa88] sm:$0xff] %v856
    %2215 = vst [vmem:[%s3 + $0xa90] sm:$0xff] %v1053
    %2216 = vst [vmem:[%s3 + $0xa98] sm:$0xff] %v1250
    %2217 = vst [vmem:[%s3 + $0xaa0] sm:$0xff] %v1447
    %2218 = vst [vmem:[%s3 + $0xaa8] sm:$0xff] %v1644
    %2219 = vst.msk [vmem:[%s3 + $0xab0] sm:$0xff] %vm1882, %v1841
    %2220 = vst [vmem:[%s3 + $0xab8] sm:$0xff] %v662
    %2221 = vst [vmem:[%s3 + $0xac0] sm:$0xff] %v859
    %2222 = vst [vmem:[%s3 + $0xac8] sm:$0xff] %v1056
    %2223 = vst [vmem:[%s3 + $0xad0] sm:$0xff] %v1253
    %2224 = vst [vmem:[%s3 + $0xad8] sm:$0xff] %v1450
    %2225 = vst [vmem:[%s3 + $0xae0] sm:$0xff] %v1647
    %2226 = vst.msk [vmem:[%s3 + $0xae8] sm:$0xff] %vm1882, %v1844
    %2227 = vst [vmem:[%s3 + $0xaf0] sm:$0xff] %v665
    %2228 = vst [vmem:[%s3 + $0xaf8] sm:$0xff] %v862
    %2229 = vst [vmem:[%s3 + $0xb00] sm:$0xff] %v1059
    %2230 = vst [vmem:[%s3 + $0xb08] sm:$0xff] %v1256
    %2231 = vst [vmem:[%s3 + $0xb10] sm:$0xff] %v1453
    %2232 = vst [vmem:[%s3 + $0xb18] sm:$0xff] %v1650
    %2233 = vst.msk [vmem:[%s3 + $0xb20] sm:$0xff] %vm1882, %v1847
    %2234 = vst [vmem:[%s3 + $0xb28] sm:$0xff] %v668
    %2235 = vst [vmem:[%s3 + $0xb30] sm:$0xff] %v865
    %2236 = vst [vmem:[%s3 + $0xb38] sm:$0xff] %v1062
    %2237 = vst [vmem:[%s3 + $0xb40] sm:$0xff] %v1259
    %2238 = vst [vmem:[%s3 + $0xb48] sm:$0xff] %v1456
    %2239 = vst [vmem:[%s3 + $0xb50] sm:$0xff] %v1653
    %2240 = vst.msk [vmem:[%s3 + $0xb58] sm:$0xff] %vm1882, %v1850
    %2241 = vst [vmem:[%s3 + $0xb60] sm:$0xff] %v671
    %2242 = vst [vmem:[%s3 + $0xb68] sm:$0xff] %v868
    %2243 = vst [vmem:[%s3 + $0xb70] sm:$0xff] %v1065
    %2244 = vst [vmem:[%s3 + $0xb78] sm:$0xff] %v1262
    %2245 = vst [vmem:[%s3 + $0xb80] sm:$0xff] %v1459
    %2246 = vst [vmem:[%s3 + $0xb88] sm:$0xff] %v1656
    %2247 = vst.msk [vmem:[%s3 + $0xb90] sm:$0xff] %vm1882, %v1853
    %2248 = vst [vmem:[%s3 + $0xb98] sm:$0xff] %v674
    %2249 = vst [vmem:[%s3 + $0xba0] sm:$0xff] %v871
    %2250 = vst [vmem:[%s3 + $0xba8] sm:$0xff] %v1068
    %2251 = vst [vmem:[%s3 + $0xbb0] sm:$0xff] %v1265
    %2252 = vst [vmem:[%s3 + $0xbb8] sm:$0xff] %v1462
    %2253 = vst [vmem:[%s3 + $0xbc0] sm:$0xff] %v1659
    %2254 = vst.msk [vmem:[%s3 + $0xbc8] sm:$0xff] %vm1882, %v1856
    %2255 = vst [vmem:[%s3 + $0xbd0] sm:$0xff] %v677
    %2256 = vst [vmem:[%s3 + $0xbd8] sm:$0xff] %v874
    %2257 = vst [vmem:[%s3 + $0xbe0] sm:$0xff] %v1071
    %2258 = vst [vmem:[%s3 + $0xbe8] sm:$0xff] %v1268
    %2259 = vst [vmem:[%s3 + $0xbf0] sm:$0xff] %v1465
    %2260 = vst [vmem:[%s3 + $0xbf8] sm:$0xff] %v1662
    %2261 = vst.msk [vmem:[%s3 + $0xc00] sm:$0xff] %vm1882, %v1859
    %2262 = vst [vmem:[%s3 + $0xc08] sm:$0xff] %v680
    %2263 = vst [vmem:[%s3 + $0xc10] sm:$0xff] %v877
    %2264 = vst [vmem:[%s3 + $0xc18] sm:$0xff] %v1074
    %2265 = vst [vmem:[%s3 + $0xc20] sm:$0xff] %v1271
    %2266 = vst [vmem:[%s3 + $0xc28] sm:$0xff] %v1468
    %2267 = vst [vmem:[%s3 + $0xc30] sm:$0xff] %v1665
    %2268 = vst.msk [vmem:[%s3 + $0xc38] sm:$0xff] %vm1882, %v1862
    %2269 = vst [vmem:[%s3 + $0xc40] sm:$0xff] %v683
    %2270 = vst [vmem:[%s3 + $0xc48] sm:$0xff] %v880
    %2271 = vst [vmem:[%s3 + $0xc50] sm:$0xff] %v1077
    %2272 = vst [vmem:[%s3 + $0xc58] sm:$0xff] %v1274
    %2273 = vst [vmem:[%s3 + $0xc60] sm:$0xff] %v1471
    %2274 = vst [vmem:[%s3 + $0xc68] sm:$0xff] %v1668
    %2275 = vst.msk [vmem:[%s3 + $0xc70] sm:$0xff] %vm1882, %v1865
    %2276 = vst [vmem:[%s3 + $0xc78] sm:$0xff] %v686
    %2277 = vst [vmem:[%s3 + $0xc80] sm:$0xff] %v883
    %2278 = vst [vmem:[%s3 + $0xc88] sm:$0xff] %v1080
    %2279 = vst [vmem:[%s3 + $0xc90] sm:$0xff] %v1277
    %2280 = vst [vmem:[%s3 + $0xc98] sm:$0xff] %v1474
    %2281 = vst [vmem:[%s3 + $0xca0] sm:$0xff] %v1671
    %2282 = vst.msk [vmem:[%s3 + $0xca8] sm:$0xff] %vm1882, %v1868
    %2283 = vst [vmem:[%s3 + $0xcb0] sm:$0xff] %v689
    %2284 = vst [vmem:[%s3 + $0xcb8] sm:$0xff] %v886
    %2285 = vst [vmem:[%s3 + $0xcc0] sm:$0xff] %v1083
    %2286 = vst [vmem:[%s3 + $0xcc8] sm:$0xff] %v1280
    %2287 = vst [vmem:[%s3 + $0xcd0] sm:$0xff] %v1477
    %2288 = vst [vmem:[%s3 + $0xcd8] sm:$0xff] %v1674
    %2289 = vst.msk [vmem:[%s3 + $0xce0] sm:$0xff] %vm1882, %v1871
    %2290 = vst [vmem:[%s3 + $0xce8] sm:$0xff] %v692
    %2291 = vst [vmem:[%s3 + $0xcf0] sm:$0xff] %v889
    %2292 = vst [vmem:[%s3 + $0xcf8] sm:$0xff] %v1086
    %2293 = vst [vmem:[%s3 + $0xd00] sm:$0xff] %v1283
    %2294 = vst [vmem:[%s3 + $0xd08] sm:$0xff] %v1480
    %2295 = vst [vmem:[%s3 + $0xd10] sm:$0xff] %v1677
    %2296 = vst.msk [vmem:[%s3 + $0xd18] sm:$0xff] %vm1882, %v1874
    // Predicated region
    $region22: #{tpu_custom_call.1} parent=1 // pred_check
      _
    $region23: #{tpu_custom_call.1} parent=1 // pred_check_branch
      %2298 = sbr.rel (0) target = $region25
    $region24: #{tpu_custom_call.1} parent=1 // pred_region
      _
    $region25: #{tpu_custom_call.1} parent=1 // pred_fallthru
      _
    // Predicated region
    $region26: #{tpu_custom_call.1} parent=1 // pred_check
      _
    $region27: #{tpu_custom_call.1} parent=1 // pred_check_branch
      %2300 = sbr.rel (0) target = $region29
    $region28: #{tpu_custom_call.1} parent=1 // pred_region
      _
    $region29: #{tpu_custom_call.1} parent=1 // pred_fallthru
      _
    %2301 = vsyncpa [#allocation3], 1
    %2302 = vsyncpa [#allocation5], 1

</llo_original>
